<compile_context>
chip_gen: v6e
topology: v6e:2x2x1
jax: 0.10.0
libtpu: 0.0.40
codegen_flags: <defaults>
</compile_context>

<pallas_src>
import jax
import jax.numpy as jnp
import numpy as np
from jax import lax
from jax.experimental import pallas as pl
from jax.experimental.pallas import tpu as pltpu

# Single-buffer weight operands (their blocks are constant over the inner grid
# axes).  Set to None to fall back to default double buffering.
_WEIGHT_BUFFERS = 1
_VMEM_LIMIT_CACHE = None


# --------------------------------------------------------------------------
# small static helpers
# --------------------------------------------------------------------------
def _vmem_limit():
    """Generation-aware scoped-VMEM limit: ~3/4 of physical capacity
    (~48 MiB on v7x, ~96 MiB on v5e/v6e), leaving headroom for compiler
    scratch, semaphores and implicit pipeline buffers."""
    global _VMEM_LIMIT_CACHE
    if _VMEM_LIMIT_CACHE is None:
        cap = 128 * 1024 * 1024
        try:
            cap = int(getattr(pltpu.get_tpu_info(), "vmem_capacity_bytes", cap))
        except Exception:
            pass
        cap = min(max(cap, 64 * 1024 * 1024), 128 * 1024 * 1024)
        _VMEM_LIMIT_CACHE = (cap * 3) // 4
    return _VMEM_LIMIT_CACHE


def _weight_spec(block_shape, index_map):
    """BlockSpec for weight operands: single-buffered when supported."""
    if _WEIGHT_BUFFERS is None:
        return pl.BlockSpec(block_shape, index_map)
    return pl.BlockSpec(block_shape, index_map,
                        pipeline_mode=pl.Buffered(_WEIGHT_BUFFERS))


def _round_up(v, m):
    return ((v + m - 1) // m) * m


def _pick_time_chunk(L, B, Hp, budget):
    """Largest divisor of L whose (double-buffered) G-in + h-out blocks fit the
    VMEM budget; falls back to a single full-length chunk rather than a
    degenerate per-timestep grid (e.g. prime L)."""
    fixed = 4 * Hp * Hp * 2 + 2 * B * Hp * 4        # bf16 W_hh + f32 h/c scratch
    per_t = 2 * B * Hp * (4 + 1) * 4                # dbl-buffered f32 G in + h out
    cap = max(1, (budget - fixed) // per_t)
    divs = [d for d in range(1, L + 1) if L % d == 0 and d <= cap]
    tl = max(divs) if divs else 1
    if tl < min(8, L) and L <= 4 * cap:
        tl = L
    return tl


def _pick_row_block(N, Hp, budget, target=512):
    """Largest multiple-of-8 divisor of N that fits the VMEM budget."""
    per_row = 2 * (2 * Hp + 4 * Hp) * 4             # dbl-buffered activations + gates
    cap = max(8, budget // per_row)
    divs = [d for d in range(1, N + 1) if N % d == 0 and d <= min(cap, target)]
    pref = [d for d in divs if d % 8 == 0]
    return max(pref) if pref else max(divs)


def _pad_to(a, axis, size):
    pad = size - a.shape[axis]
    if pad <= 0:
        return a
    cfg = [(0, 0)] * a.ndim
    cfg[axis] = (0, pad)
    return jnp.pad(a, cfg)


def _pad_gates(w, H, Hp):
    """(4H, ...) -> (4Hp, ...): zero-pad each of the i, f, g, o blocks to Hp."""
    rest = w.shape[1:]
    w = w.reshape((4, H) + rest)
    w = _pad_to(w, 1, Hp)
    return w.reshape((4 * Hp,) + rest)


# --------------------------------------------------------------------------
# Conv1d(k=3, stride=1, pad=1) + ReLU, two layers fused, grid over batch.
# Output is written time-major as (L, B*Hp) so the LSTM's (l, b) row layout
# needs no HBM transpose.
# --------------------------------------------------------------------------
def _shift_down(x):
    """out[t] = x[t-1]; zero row at t=0."""
    return jnp.concatenate([jnp.zeros_like(x[:1]), x[:-1]], axis=0)


def _shift_up(x):
    """out[t] = x[t+1]; zero row at t=L-1."""
    return jnp.concatenate([x[1:], jnp.zeros_like(x[:1])], axis=0)


def _conv1d_relu(x, w, b):
    """x: (L, C) f32; w: (3C, Cout) rows [tap t-1 | tap t | tap t+1]; b: (1, Cout)."""
    C = x.shape[1]
    mx = w.dtype
    xm = _shift_down(x).astype(mx)
    xc = x.astype(mx)
    xp = _shift_up(x).astype(mx)
    y = (jnp.dot(xm, w[0:C], preferred_element_type=jnp.float32)
         + jnp.dot(xc, w[C:2 * C], preferred_element_type=jnp.float32)
         + jnp.dot(xp, w[2 * C:3 * C], preferred_element_type=jnp.float32))
    return jnp.maximum(y + b, 0.0)


def conv_stack_kernel(x_ref, w1_ref, b1_ref, w2_ref, b2_ref, out_ref):
    h1 = _conv1d_relu(x_ref[...], w1_ref[...], b1_ref[...])   # (L, Hp) f32
    h2 = _conv1d_relu(h1, w2_ref[...], b2_ref[...])           # (L, Hp) f32
    out_ref[...] = h2.astype(out_ref.dtype)


def conv_stack(x, w1, b1, w2, b2, out_dtype):
    B, L, Cin = x.shape
    Hp = w1.shape[-1]
    return pl.pallas_call(
        conv_stack_kernel,
        out_shape=jax.ShapeDtypeStruct((L, B * Hp), out_dtype),
        grid=(B,),
        in_specs=[
            pl.BlockSpec((None, L, Cin), lambda b: (b, 0, 0)),
            _weight_spec((3 * Cin, Hp), lambda b: (0, 0)),
            _weight_spec((1, Hp), lambda b: (0, 0)),
            _weight_spec((3 * Hp, Hp), lambda b: (0, 0)),
            _weight_spec((1, Hp), lambda b: (0, 0)),
        ],
        out_specs=pl.BlockSpec((L, Hp), lambda b: (0, b)),
        compiler_params=pltpu.CompilerParams(
            dimension_semantics=("parallel",),
            vmem_limit_bytes=_vmem_limit()),
    )(x, w1, b1, w2, b2)


# --------------------------------------------------------------------------
# LSTM input projection (hoisted out of the recurrence): one big row-tiled
# matmul per layer, both directions in one call.  Rows are (l, b)-ordered.
# --------------------------------------------------------------------------
def _make_proj_kernel(n_parts):
    def kernel(*refs):
        xs = refs[:n_parts]
        ws = refs[n_parts:2 * n_parts]
        b_ref = refs[2 * n_parts]
        out_ref = refs[2 * n_parts + 1]
        acc = b_ref[...]
        for x_ref, w_ref in zip(xs, ws):
            acc = acc + jnp.dot(x_ref[...].astype(w_ref.dtype), w_ref[...],
                                preferred_element_type=jnp.float32)
        out_ref[...] = acc.astype(out_ref.dtype)
    return kernel


def lstm_input_proj_first(x2d, w_ih_t, bias, row_block):
    """x2d: (N, Hp); w_ih_t: (2, Hp, 4Hp); bias: (2, 1, 4Hp) -> G: (2, N, 4Hp) f32."""
    N, Hp = x2d.shape
    G4 = w_ih_t.shape[-1]
    TM = row_block
    return pl.pallas_call(
        _make_proj_kernel(1),
        out_shape=jax.ShapeDtypeStruct((2, N, G4), jnp.float32),
        grid=(2, N // TM),
        in_specs=[
            pl.BlockSpec((TM, Hp), lambda d, m: (m, 0)),
            _weight_spec((None, Hp, G4), lambda d, m: (d, 0, 0)),
            _weight_spec((None, 1, G4), lambda d, m: (d, 0, 0)),
        ],
        out_specs=pl.BlockSpec((None, TM, G4), lambda d, m: (d, m, 0)),
        compiler_params=pltpu.CompilerParams(
            dimension_semantics=("parallel", "parallel"),
            vmem_limit_bytes=_vmem_limit()),
    )(x2d, w_ih_t, bias)


def lstm_input_proj_next(prev3, w_ih_t, bias, row_block):
    """prev3: (2, N, Hp) direction-separated activations of the previous layer;
    w_ih_t: (2, 2*Hp, 4Hp) rows = [fwd-half | bwd-half].  The halves are
    selected via index maps; the two directions are never concatenated in HBM."""
    _, N, Hp = prev3.shape
    G4 = w_ih_t.shape[-1]
    TM = row_block
    return pl.pallas_call(
        _make_proj_kernel(2),
        out_shape=jax.ShapeDtypeStruct((2, N, G4), jnp.float32),
        grid=(2, N // TM),
        in_specs=[
            pl.BlockSpec((None, TM, Hp), lambda d, m: (0, m, 0)),   # fwd activations
            pl.BlockSpec((None, TM, Hp), lambda d, m: (1, m, 0)),   # bwd activations
            _weight_spec((None, Hp, G4), lambda d, m: (d, 0, 0)),   # W_ih rows [0:Hp]
            _weight_spec((None, Hp, G4), lambda d, m: (d, 1, 0)),   # W_ih rows [Hp:2Hp]
            _weight_spec((None, 1, G4), lambda d, m: (d, 0, 0)),
        ],
        out_specs=pl.BlockSpec((None, TM, G4), lambda d, m: (d, m, 0)),
        compiler_params=pltpu.CompilerParams(
            dimension_semantics=("parallel", "parallel"),
            vmem_limit_bytes=_vmem_limit()),
    )(prev3, prev3, w_ih_t, w_ih_t, bias)


# --------------------------------------------------------------------------
# LSTM recurrence: grid (direction, time-chunk).  h/c carried in VMEM scratch
# across chunks; only the small h @ W_hh GEMM remains in the loop.  The reverse
# direction reverses the chunk order via the index map and the in-chunk order
# via arithmetic on program_id(0).  PyTorch gate order i, f, g, o.
# --------------------------------------------------------------------------
def lstm_rec_kernel(g_ref, whh_ref, out_ref, h_scr, c_scr):
    d = pl.program_id(0)       # 0 = forward, 1 = reverse
    chunk = pl.program_id(1)
    TL = g_ref.shape[0]
    Hp = whh_ref.shape[0]

    @pl.when(chunk == 0)
    def _():
        h_scr[...] = jnp.zeros_like(h_scr)
        c_scr[...] = jnp.zeros_like(c_scr)

    whh = whh_ref[...]                               # (Hp, 4Hp) bf16, resident

    def step(tt, carry):
        h, c_cell = carry
        # forward: t = tt ; reverse: t = TL-1-tt (chunk order already reversed)
        t = tt + d * (TL - 1 - 2 * tt)
        gates = g_ref[t] + jnp.dot(h.astype(whh.dtype), whh,
                                   preferred_element_type=jnp.float32)
        i_g = jax.nn.sigmoid(gates[:, 0 * Hp:1 * Hp])
        f_g = jax.nn.sigmoid(gates[:, 1 * Hp:2 * Hp])
        g_g = jnp.tanh(gates[:, 2 * Hp:3 * Hp])
        o_g = jax.nn.sigmoid(gates[:, 3 * Hp:4 * Hp])
        c_new = f_g * c_cell + i_g * g_g
        h_new = o_g * jnp.tanh(c_new)
        out_ref[t] = h_new
        return (h_new, c_new)

    # unroll=2: step t's EUP/VPU work and store co-issue with t+1's addressing
    # and MXU pushes (the serial h dependence limits deeper unrolling).
    h_fin, c_fin = lax.fori_loop(0, TL, step, (h_scr[...], c_scr[...]), unroll=2)
    h_scr[...] = h_fin
    c_scr[...] = c_fin


def lstm_recurrent(G, w_hh_t, time_chunk):
    """G: (2, L, B, 4Hp) f32 pre-projected gates; w_hh_t: (2, Hp, 4Hp) -> (2, L, B, Hp)."""
    _, L, B, G4 = G.shape
    Hp = w_hh_t.shape[1]
    TL = time_chunk
    assert L % TL == 0
    NC = L // TL

    def seq_map(d, c):
        # forward walks chunks 0..NC-1, reverse walks NC-1..0
        return (d, c + d * (NC - 1 - 2 * c), 0, 0)

    return pl.pallas_call(
        lstm_rec_kernel,
        out_shape=jax.ShapeDtypeStruct((2, L, B, Hp), jnp.float32),
        grid=(2, NC),
        in_specs=[
            pl.BlockSpec((None, TL, B, G4), seq_map),
            _weight_spec((None, Hp, G4), lambda d, c: (d, 0, 0)),
        ],
        out_specs=pl.BlockSpec((None, TL, B, Hp), seq_map),
        scratch_shapes=[pltpu.VMEM((B, Hp), jnp.float32),   # h carry (f32)
                        pltpu.VMEM((B, Hp), jnp.float32)],  # c carry (f32)
        compiler_params=pltpu.CompilerParams(
            dimension_semantics=("parallel", "arbitrary"),
            vmem_limit_bytes=_vmem_limit()),
    )(G, w_hh_t)


# --------------------------------------------------------------------------
# ReLU -> Linear, row-tiled, direction-separated inputs, lane-padded output.
# --------------------------------------------------------------------------
def fc_kernel(hf_ref, hb_ref, wf_ref, wb_ref, b_ref, out_ref):
    mx = wf_ref.dtype
    hf = jnp.maximum(hf_ref[...], 0.0).astype(mx)   # ReLU before fc, as in forward
    hb = jnp.maximum(hb_ref[...], 0.0).astype(mx)
    out_ref[...] = (jnp.dot(hf, wf_ref[...], preferred_element_type=jnp.float32)
                    + jnp.dot(hb, wb_ref[...], preferred_element_type=jnp.float32)
                    + b_ref[...])


def fc_fused(prev3, wf, wb, b, row_block):
    _, N, Hp = prev3.shape
    Opad = wf.shape[1]
    TM = row_block
    return pl.pallas_call(
        fc_kernel,
        out_shape=jax.ShapeDtypeStruct((N, Opad), jnp.float32),
        grid=(N // TM,),
        in_specs=[
            pl.BlockSpec((None, TM, Hp), lambda m: (0, m, 0)),
            pl.BlockSpec((None, TM, Hp), lambda m: (1, m, 0)),
            _weight_spec((Hp, Opad), lambda m: (0, 0)),
            _weight_spec((Hp, Opad), lambda m: (0, 0)),
            _weight_spec((1, Opad), lambda m: (0, 0)),
        ],
        out_specs=pl.BlockSpec((TM, Opad), lambda m: (m, 0)),
        compiler_params=pltpu.CompilerParams(
            dimension_semantics=("parallel",),
            vmem_limit_bytes=_vmem_limit()),
    )(prev3, prev3, wf, wb, b)


# --------------------------------------------------------------------------
# Parameters (PyTorch-shaped) and full forward pass.
# --------------------------------------------------------------------------
def init_params(key, input_dim, hidden_dim, output_dim, n_layers):
    H = hidden_dim

    def nrm(k, shape, scale=0.1):
        return scale * jax.random.normal(k, shape, dtype=jnp.float32)

    keys = iter(jax.random.split(key, 8 + 8 * n_layers + 2))
    p = {}
    p["conv1_w"] = nrm(next(keys), (H, input_dim, 3))
    p["conv1_b"] = nrm(next(keys), (H,))
    p["conv2_w"] = nrm(next(keys), (H, H, 3))
    p["conv2_b"] = nrm(next(keys), (H,))
    lstm = []
    for layer in range(n_layers):
        din = H if layer == 0 else 2 * H
        dirs = []
        for _ in range(2):  # forward, reverse
            w_ih = nrm(next(keys), (4 * H, din))
            w_hh = nrm(next(keys), (4 * H, H))
            b_ih = nrm(next(keys), (4 * H,))
            b_hh = nrm(next(keys), (4 * H,))
            dirs.append((w_ih, w_hh, b_ih, b_hh))
        lstm.append(dirs)
    p["lstm"] = lstm
    p["fc_w"] = nrm(next(keys), (output_dim, 2 * H))
    p["fc_b"] = nrm(next(keys), (output_dim,))
    return p


def gru_net_forward(params, x, h=None, *, time_chunk=None, row_block=None,
                    use_bf16=True):
    """x: (B, L, input_dim).  `h` is accepted but ignored (as in the PyTorch
    forward).  Returns (B*L, output_dim)."""
    del h
    B, L, Cin = x.shape
    H = params["conv1_w"].shape[0]
    O = params["fc_w"].shape[0]
    N = L * B

    # Lane-align the hidden size (e.g. 816 -> 896): gate slices, h/c buffers and
    # stores become whole 128-lane vregs.  Padded gate lanes provably stay 0.
    Hp = _round_up(H, 128)
    G4 = 4 * Hp
    Opad = _round_up(O, 128)
    mx = jnp.bfloat16 if use_bf16 else jnp.float32    # MXU operand dtype

    budget = _vmem_limit() // 2
    if time_chunk is None:
        time_chunk = _pick_time_chunk(L, B, Hp, budget)
    if row_block is None:
        row_block = _pick_row_block(N, Hp, budget)
    assert L % time_chunk == 0, "time_chunk must divide L"
    assert N % row_block == 0, "row_block must divide B*L"

    # ---- conv weights: (Cout, Cin, 3) -> tap-major (3*Cin, Hp), zero-padded.
    w1 = _pad_to(jnp.transpose(params["conv1_w"], (2, 1, 0)).reshape(3 * Cin, H),
                 1, Hp).astype(mx)
    b1 = _pad_to(params["conv1_b"], 0, Hp).reshape(1, Hp)
    w2 = jnp.transpose(params["conv2_w"], (2, 1, 0))                 # (3, H, H)
    w2 = _pad_to(_pad_to(w2, 1, Hp), 2, Hp).reshape(3 * Hp, Hp).astype(mx)
    b2 = _pad_to(params["conv2_b"], 0, Hp).reshape(1, Hp)

    # Conv writes time-major (L, B*Hp); reshaping to (N, Hp) rows ordered (l, b)
    # is free, so no HBM transpose between the conv and the LSTM.
    conv_out = conv_stack(x, w1, b1, w2, b2, mx)
    cur2d = conv_out.reshape(N, Hp)
    prev3 = None

    def prep_sq_weight(w):            # (4H, H) -> (Hp, 4Hp), per-gate padded
        w = _pad_to(_pad_gates(w, H, Hp), 1, Hp)
        return jnp.transpose(w).astype(mx)

    def prep_ih_next(w):              # (4H, 2H) -> (2Hp, 4Hp) rows [fwd | bwd]
        w = _pad_gates(w, H, Hp)                        # (4Hp, 2H)
        wf_ = jnp.transpose(_pad_to(w[:, :H], 1, Hp))   # (Hp, 4Hp)
        wb_ = jnp.transpose(_pad_to(w[:, H:], 1, Hp))
        return jnp.concatenate([wf_, wb_], axis=0).astype(mx)

    for li, layer_params in enumerate(params["lstm"]):
        (wif, whf, bif, bhf), (wib, whb, bib, bhb) = layer_params
        w_hh_t = jnp.stack([prep_sq_weight(whf), prep_sq_weight(whb)], 0)  # (2, Hp, 4Hp)
        bias = jnp.stack([_pad_gates(bif + bhf, H, Hp),
                          _pad_gates(bib + bhb, H, Hp)], 0).reshape(2, 1, G4)
        if li == 0:
            w_ih_t = jnp.stack([prep_sq_weight(wif), prep_sq_weight(wib)], 0)
            Gm = lstm_input_proj_first(cur2d, w_ih_t, bias, row_block)
        else:
            w_ih_t = jnp.stack([prep_ih_next(wif), prep_ih_next(wib)], 0)
            Gm = lstm_input_proj_next(prev3, w_ih_t, bias, row_block)
        Gm = Gm.reshape(2, L, B, G4)
        out = lstm_recurrent(Gm, w_hh_t, time_chunk)             # (2, L, B, Hp)
        prev3 = out.reshape(2, N, Hp)

    # ---- ReLU -> Linear with lane-dense padded output (O -> multiple of 128).
    wf = _pad_to(_pad_to(jnp.transpose(params["fc_w"][:, :H]), 0, Hp), 1, Opad).astype(mx)
    wb = _pad_to(_pad_to(jnp.transpose(params["fc_w"][:, H:]), 0, Hp), 1, Opad).astype(mx)
    bp = _pad_to(params["fc_b"], 0, Opad).reshape(1, Opad)
    y_pad = fc_fused(prev3, wf, wb, bp, row_block)               # (N, Opad), rows (l, b)

    y = y_pad[:, :O].reshape(L, B, O)
    return jnp.transpose(y, (1, 0, 2)).reshape(B * L, O)


# --------------------------------------------------------------------------
# Pure-JAX reference (same math, all f32) for the correctness check.
# --------------------------------------------------------------------------
def reference_forward(params, x):
    B, L, _ = x.shape

    def conv1d(x_blc, w, b):  # w: (Cout, Cin, 3)
        xp = jnp.pad(x_blc, ((0, 0), (1, 1), (0, 0)))
        y = (jnp.einsum("blc,oc->blo", xp[:, 0:L, :], w[:, :, 0])
             + jnp.einsum("blc,oc->blo", xp[:, 1:L + 1, :], w[:, :, 1])
             + jnp.einsum("blc,oc->blo", xp[:, 2:L + 2, :], w[:, :, 2])
             + b)
        return y

    out = jax.nn.relu(conv1d(x, params["conv1_w"], params["conv1_b"]))
    out = jax.nn.relu(conv1d(out, params["conv2_w"], params["conv2_b"]))

    def lstm_scan(x_lbd, w_ih, w_hh, b_ih, b_hh):
        H = w_hh.shape[1]

        def step(carry, xt):
            h, c = carry
            g = xt @ w_ih.T + h @ w_hh.T + b_ih + b_hh
            i = jax.nn.sigmoid(g[:, :H])
            f = jax.nn.sigmoid(g[:, H:2 * H])
            gg = jnp.tanh(g[:, 2 * H:3 * H])
            o = jax.nn.sigmoid(g[:, 3 * H:])
            c = f * c + i * gg
            h = o * jnp.tanh(c)
            return (h, c), h

        h0 = jnp.zeros((x_lbd.shape[1], H), jnp.float32)
        c0 = jnp.zeros_like(h0)
        _, hs = lax.scan(step, (h0, c0), x_lbd)
        return hs

    xt = jnp.transpose(out, (1, 0, 2))
    for layer_params in params["lstm"]:
        (wif, whf, bif, bhf), (wib, whb, bib, bhb) = layer_params
        of = lstm_scan(xt, wif, whf, bif, bhf)
        ob = lstm_scan(xt[::-1], wib, whb, bib, bhb)[::-1]
        xt = jnp.concatenate([of, ob], axis=-1)
    out = jnp.transpose(xt, (1, 0, 2))
    y = jax.nn.relu(out) @ params["fc_w"].T + params["fc_b"]
    return y.reshape(-1, params["fc_w"].shape[0])


if __name__ == "__main__":
    B, L = 2, 16
    input_dim, hidden_dim, output_dim, n_layers = 8, 32, 10, 2

    key = jax.random.PRNGKey(0)
    kp, kx = jax.random.split(key)
    params = init_params(kp, input_dim, hidden_dim, output_dim, n_layers)
    x = jax.random.normal(kx, (B, L, input_dim), dtype=jnp.float32)
    h0 = jnp.zeros((2 * n_layers, B, hidden_dim), jnp.float32)  # unused, mirrors signature

    y_ref = np.asarray(jax.block_until_ready(reference_forward(params, x)))

    def _run_and_check(use_bf16, tol):
        # time_chunk=8 / row_block=16 force multi-chunk / multi-tile grids at the
        # toy shape so the scratch carry, chunk-order reversal and row tiling are
        # exercised.
        y = jax.block_until_ready(
            gru_net_forward(params, x, h0, time_chunk=8, row_block=16,
                            use_bf16=use_bf16))
        assert y.shape == (B * L, output_dim), y.shape
        y = np.asarray(y)
        if not np.allclose(y, y_ref, rtol=tol, atol=tol):
            raise AssertionError(
                "Pallas output does not match JAX reference "
                f"(use_bf16={use_bf16}, max|err|={np.max(np.abs(y - y_ref)):.3e})")

    try:
        _run_and_check(use_bf16=False, tol=2e-3)   # exact-math structural check
        _run_and_check(use_bf16=True, tol=5e-2)    # production config (bf16 MXU operands)
    except Exception:
        # Some jax versions reject single-buffered weights (pl.Buffered(1));
        # retry once with default double buffering before giving up.
        _WEIGHT_BUFFERS = None
        _run_and_check(use_bf16=False, tol=2e-3)
        _run_and_check(use_bf16=True, tol=5e-2)

    print("KERNEL_OK")
</pallas_src>

<mosaic_0001>
module attributes {stable_mosaic.version = 11 : i64} {
  func.func @conv_stack_kernel(%arg0: i32, %arg1: memref<1x16x8xf32, #tpu.memory_space<vmem>>, %arg2: memref<24x128xf32, #tpu.memory_space<vmem>>, %arg3: memref<1x128xf32, #tpu.memory_space<vmem>>, %arg4: memref<384x128xf32, #tpu.memory_space<vmem>>, %arg5: memref<1x128xf32, #tpu.memory_space<vmem>>, %arg6: memref<16x128xf32, #tpu.memory_space<vmem>>) attributes {dimension_semantics = [#tpu.dimension_semantics<parallel>], iteration_bounds = array<i64: 2>, scalar_prefetch = 0 : i64, scratch_operands = 0 : i64, tpu.core_type = #tpu.core_type<tc>, window_params = [{transform_indices = @transform_0, window_bounds = array<i64: 1, 16, 8>}, {pipeline_mode = #tpu.pipeline_mode<synchronous>, transform_indices = @transform_1, window_bounds = array<i64: 24, 128>}, {pipeline_mode = #tpu.pipeline_mode<synchronous>, transform_indices = @transform_2, window_bounds = array<i64: 1, 128>}, {pipeline_mode = #tpu.pipeline_mode<synchronous>, transform_indices = @transform_3, window_bounds = array<i64: 384, 128>}, {pipeline_mode = #tpu.pipeline_mode<synchronous>, transform_indices = @transform_4, window_bounds = array<i64: 1, 128>}, {transform_indices = @transform_5, window_bounds = array<i64: 16, 128>}]} {
    %c0 = arith.constant 0 : index
    %c0_0 = arith.constant 0 : index
    %c0_1 = arith.constant 0 : index
    %0 = vector.load %arg1[%c0, %c0_0, %c0_1] : memref<1x16x8xf32, #tpu.memory_space<vmem>>, vector<1x16x8xf32>
    %1 = vector.shape_cast %0 : vector<1x16x8xf32> to vector<16x8xf32>
    %c0_2 = arith.constant 0 : index
    %c0_3 = arith.constant 0 : index
    %2 = vector.load %arg2[%c0_2, %c0_3] : memref<24x128xf32, #tpu.memory_space<vmem>>, vector<24x128xf32>
    %c0_4 = arith.constant 0 : index
    %c0_5 = arith.constant 0 : index
    %3 = vector.load %arg3[%c0_4, %c0_5] : memref<1x128xf32, #tpu.memory_space<vmem>>, vector<1x128xf32>
    %cst = arith.constant 0.000000e+00 : f32
    %4 = vector.broadcast %cst : f32 to vector<1x8xf32>
    %5 = vector.extract_strided_slice %1 {offsets = [0, 0], sizes = [15, 8], strides = [1, 1]} : vector<16x8xf32> to vector<15x8xf32>
    %6 = tpu.concatenate %4, %5 in 0 : vector<1x8xf32>, vector<15x8xf32> -> vector<16x8xf32>
    %7 = vector.extract_strided_slice %1 {offsets = [1, 0], sizes = [15, 8], strides = [1, 1]} : vector<16x8xf32> to vector<15x8xf32>
    %cst_6 = arith.constant 0.000000e+00 : f32
    %8 = vector.broadcast %cst_6 : f32 to vector<1x8xf32>
    %9 = tpu.concatenate %7, %8 in 0 : vector<15x8xf32>, vector<1x8xf32> -> vector<16x8xf32>
    %10 = vector.extract_strided_slice %2 {offsets = [0, 0], sizes = [8, 128], strides = [1, 1]} : vector<24x128xf32> to vector<8x128xf32>
    %cst_7 = arith.constant dense<0.000000e+00> : vector<16x128xf32>
    %11 = tpu.matmul %6, %10, %cst_7 {dimension_numbers = #tpu.dot_dimension_numbers<[1], [0], [0], [1], [0, 0, 1, 1], [], []>} : vector<16x8xf32>, vector<8x128xf32>, vector<16x128xf32> -> vector<16x128xf32>
    %12 = vector.extract_strided_slice %2 {offsets = [8, 0], sizes = [8, 128], strides = [1, 1]} : vector<24x128xf32> to vector<8x128xf32>
    %cst_8 = arith.constant dense<0.000000e+00> : vector<16x128xf32>
    %13 = tpu.matmul %1, %12, %cst_8 {dimension_numbers = #tpu.dot_dimension_numbers<[1], [0], [0], [1], [0, 0, 1, 1], [], []>} : vector<16x8xf32>, vector<8x128xf32>, vector<16x128xf32> -> vector<16x128xf32>
    %14 = arith.addf %11, %13 : vector<16x128xf32>
    %15 = vector.extract_strided_slice %2 {offsets = [16, 0], sizes = [8, 128], strides = [1, 1]} : vector<24x128xf32> to vector<8x128xf32>
    %cst_9 = arith.constant dense<0.000000e+00> : vector<16x128xf32>
    %16 = tpu.matmul %9, %15, %cst_9 {dimension_numbers = #tpu.dot_dimension_numbers<[1], [0], [0], [1], [0, 0, 1, 1], [], []>} : vector<16x8xf32>, vector<8x128xf32>, vector<16x128xf32> -> vector<16x128xf32>
    %17 = arith.addf %14, %16 : vector<16x128xf32>
    %18 = vector.broadcast %3 : vector<1x128xf32> to vector<16x128xf32>
    %19 = arith.addf %17, %18 : vector<16x128xf32>
    %cst_10 = arith.constant 0.000000e+00 : f32
    %20 = vector.broadcast %cst_10 : f32 to vector<16x128xf32>
    %21 = arith.maximumf %19, %20 : vector<16x128xf32>
    %c0_11 = arith.constant 0 : index
    %c0_12 = arith.constant 0 : index
    %22 = vector.load %arg4[%c0_11, %c0_12] : memref<384x128xf32, #tpu.memory_space<vmem>>, vector<384x128xf32>
    %c0_13 = arith.constant 0 : index
    %c0_14 = arith.constant 0 : index
    %23 = vector.load %arg5[%c0_13, %c0_14] : memref<1x128xf32, #tpu.memory_space<vmem>>, vector<1x128xf32>
    %cst_15 = arith.constant 0.000000e+00 : f32
    %24 = vector.broadcast %cst_15 : f32 to vector<1x128xf32>
    %25 = vector.extract_strided_slice %21 {offsets = [0, 0], sizes = [15, 128], strides = [1, 1]} : vector<16x128xf32> to vector<15x128xf32>
    %26 = tpu.concatenate %24, %25 in 0 : vector<1x128xf32>, vector<15x128xf32> -> vector<16x128xf32>
    %27 = vector.extract_strided_slice %21 {offsets = [1, 0], sizes = [15, 128], strides = [1, 1]} : vector<16x128xf32> to vector<15x128xf32>
    %cst_16 = arith.constant 0.000000e+00 : f32
    %28 = vector.broadcast %cst_16 : f32 to vector<1x128xf32>
    %29 = tpu.concatenate %27, %28 in 0 : vector<15x128xf32>, vector<1x128xf32> -> vector<16x128xf32>
    %30 = vector.extract_strided_slice %22 {offsets = [0, 0], sizes = [128, 128], strides = [1, 1]} : vector<384x128xf32> to vector<128x128xf32>
    %cst_17 = arith.constant dense<0.000000e+00> : vector<16x128xf32>
    %31 = tpu.matmul %26, %30, %cst_17 {dimension_numbers = #tpu.dot_dimension_numbers<[1], [0], [0], [1], [0, 0, 1, 1], [], []>} : vector<16x128xf32>, vector<128x128xf32>, vector<16x128xf32> -> vector<16x128xf32>
    %32 = vector.extract_strided_slice %22 {offsets = [128, 0], sizes = [128, 128], strides = [1, 1]} : vector<384x128xf32> to vector<128x128xf32>
    %cst_18 = arith.constant dense<0.000000e+00> : vector<16x128xf32>
    %33 = tpu.matmul %21, %32, %cst_18 {dimension_numbers = #tpu.dot_dimension_numbers<[1], [0], [0], [1], [0, 0, 1, 1], [], []>} : vector<16x128xf32>, vector<128x128xf32>, vector<16x128xf32> -> vector<16x128xf32>
    %34 = arith.addf %31, %33 : vector<16x128xf32>
    %35 = vector.extract_strided_slice %22 {offsets = [256, 0], sizes = [128, 128], strides = [1, 1]} : vector<384x128xf32> to vector<128x128xf32>
    %cst_19 = arith.constant dense<0.000000e+00> : vector<16x128xf32>
    %36 = tpu.matmul %29, %35, %cst_19 {dimension_numbers = #tpu.dot_dimension_numbers<[1], [0], [0], [1], [0, 0, 1, 1], [], []>} : vector<16x128xf32>, vector<128x128xf32>, vector<16x128xf32> -> vector<16x128xf32>
    %37 = arith.addf %34, %36 : vector<16x128xf32>
    %38 = vector.broadcast %23 : vector<1x128xf32> to vector<16x128xf32>
    %39 = arith.addf %37, %38 : vector<16x128xf32>
    %cst_20 = arith.constant 0.000000e+00 : f32
    %40 = vector.broadcast %cst_20 : f32 to vector<16x128xf32>
    %41 = arith.maximumf %39, %40 : vector<16x128xf32>
    %c0_21 = arith.constant 0 : index
    %c0_22 = arith.constant 0 : index
    %42 = vector.load %arg6[%c0_21, %c0_22] : memref<16x128xf32, #tpu.memory_space<vmem>>, vector<16x128xf32>
    tpu.vector_store %arg6[%c0_21, %c0_22], %41 {strides = array<i32>} : memref<16x128xf32, #tpu.memory_space<vmem>>, vector<16x128xf32>,
    return
  }
  func.func @transform_0(%arg0: i32) -> (i32, i32, i32) {
    %c0_i32 = arith.constant 0 : i32
    %c0_i32_0 = arith.constant 0 : i32
    %c0_i32_1 = arith.constant 0 : i32
    return %arg0, %c0_i32, %c0_i32_0 : i32, i32, i32
  }
  func.func @transform_1(%arg0: i32) -> (i32, i32) {
    %c0_i32 = arith.constant 0 : i32
    %c0_i32_0 = arith.constant 0 : i32
    %c0_i32_1 = arith.constant 0 : i32
    return %c0_i32, %c0_i32_0 : i32, i32
  }
  func.func @transform_2(%arg0: i32) -> (i32, i32) {
    %c0_i32 = arith.constant 0 : i32
    %c0_i32_0 = arith.constant 0 : i32
    %c0_i32_1 = arith.constant 0 : i32
    return %c0_i32, %c0_i32_0 : i32, i32
  }
  func.func @transform_3(%arg0: i32) -> (i32, i32) {
    %c0_i32 = arith.constant 0 : i32
    %c0_i32_0 = arith.constant 0 : i32
    %c0_i32_1 = arith.constant 0 : i32
    return %c0_i32, %c0_i32_0 : i32, i32
  }
  func.func @transform_4(%arg0: i32) -> (i32, i32) {
    %c0_i32 = arith.constant 0 : i32
    %c0_i32_0 = arith.constant 0 : i32
    %c0_i32_1 = arith.constant 0 : i32
    return %c0_i32, %c0_i32_0 : i32, i32
  }
  func.func @transform_5(%arg0: i32) -> (i32, i32) {
    %c0_i32 = arith.constant 0 : i32
    %c0_i32_0 = arith.constant 0 : i32
    return %c0_i32, %arg0 : i32, i32
  }
}

module attributes {stable_mosaic.version = 11 : i64} {
  func.func @conv_stack_kernel(%arg0: i32, %arg1: memref<1x16x8xf32, #tpu.memory_space<vmem>>, %arg2: memref<24x128xf32, #tpu.memory_space<vmem>>, %arg3: memref<1x128xf32, #tpu.memory_space<vmem>>, %arg4: memref<384x128xf32, #tpu.memory_space<vmem>>, %arg5: memref<1x128xf32, #tpu.memory_space<vmem>>, %arg6: memref<16x128xf32, #tpu.memory_space<vmem>>) attributes {dimension_semantics = [#tpu.dimension_semantics<parallel>], iteration_bounds = array<i64: 2>, scalar_prefetch = 0 : i64, scratch_operands = 0 : i64, tpu.core_type = #tpu.core_type<tc>, window_params = [{transform_indices = @transform_0, window_bounds = array<i64: 1, 16, 8>}, {pipeline_mode = #tpu.pipeline_mode<synchronous>, transform_indices = @transform_1, window_bounds = array<i64: 24, 128>}, {pipeline_mode = #tpu.pipeline_mode<synchronous>, transform_indices = @transform_2, window_bounds = array<i64: 1, 128>}, {pipeline_mode = #tpu.pipeline_mode<synchronous>, transform_indices = @transform_3, window_bounds = array<i64: 384, 128>}, {pipeline_mode = #tpu.pipeline_mode<synchronous>, transform_indices = @transform_4, window_bounds = array<i64: 1, 128>}, {transform_indices = @transform_5, window_bounds = array<i64: 16, 128>}]} {
    %c0 = arith.constant 0 : index
    %c0_0 = arith.constant 0 : index
    %c0_1 = arith.constant 0 : index
    %0 = vector.load %arg1[%c0, %c0_0, %c0_1] : memref<1x16x8xf32, #tpu.memory_space<vmem>>, vector<1x16x8xf32>
    %1 = vector.shape_cast %0 : vector<1x16x8xf32> to vector<16x8xf32>
    %c0_2 = arith.constant 0 : index
    %c0_3 = arith.constant 0 : index
    %2 = vector.load %arg2[%c0_2, %c0_3] : memref<24x128xf32, #tpu.memory_space<vmem>>, vector<24x128xf32>
    %c0_4 = arith.constant 0 : index
    %c0_5 = arith.constant 0 : index
    %3 = vector.load %arg3[%c0_4, %c0_5] : memref<1x128xf32, #tpu.memory_space<vmem>>, vector<1x128xf32>
    %cst = arith.constant 0.000000e+00 : f32
    %4 = vector.broadcast %cst : f32 to vector<1x8xf32>
    %5 = vector.extract_strided_slice %1 {offsets = [0, 0], sizes = [15, 8], strides = [1, 1]} : vector<16x8xf32> to vector<15x8xf32>
    %6 = tpu.concatenate %4, %5 in 0 : vector<1x8xf32>, vector<15x8xf32> -> vector<16x8xf32>
    %7 = vector.extract_strided_slice %1 {offsets = [1, 0], sizes = [15, 8], strides = [1, 1]} : vector<16x8xf32> to vector<15x8xf32>
    %cst_6 = arith.constant 0.000000e+00 : f32
    %8 = vector.broadcast %cst_6 : f32 to vector<1x8xf32>
    %9 = tpu.concatenate %7, %8 in 0 : vector<15x8xf32>, vector<1x8xf32> -> vector<16x8xf32>
    %10 = vector.extract_strided_slice %2 {offsets = [0, 0], sizes = [8, 128], strides = [1, 1]} : vector<24x128xf32> to vector<8x128xf32>
    %cst_7 = arith.constant dense<0.000000e+00> : vector<16x128xf32>
    %11 = tpu.matmul %6, %10, %cst_7 {dimension_numbers = #tpu.dot_dimension_numbers<[1], [0], [0], [1], [0, 0, 1, 1], [], []>} : vector<16x8xf32>, vector<8x128xf32>, vector<16x128xf32> -> vector<16x128xf32>
    %12 = vector.extract_strided_slice %2 {offsets = [8, 0], sizes = [8, 128], strides = [1, 1]} : vector<24x128xf32> to vector<8x128xf32>
    %cst_8 = arith.constant dense<0.000000e+00> : vector<16x128xf32>
    %13 = tpu.matmul %1, %12, %cst_8 {dimension_numbers = #tpu.dot_dimension_numbers<[1], [0], [0], [1], [0, 0, 1, 1], [], []>} : vector<16x8xf32>, vector<8x128xf32>, vector<16x128xf32> -> vector<16x128xf32>
    %14 = arith.addf %11, %13 : vector<16x128xf32>
    %15 = vector.extract_strided_slice %2 {offsets = [16, 0], sizes = [8, 128], strides = [1, 1]} : vector<24x128xf32> to vector<8x128xf32>
    %cst_9 = arith.constant dense<0.000000e+00> : vector<16x128xf32>
    %16 = tpu.matmul %9, %15, %cst_9 {dimension_numbers = #tpu.dot_dimension_numbers<[1], [0], [0], [1], [0, 0, 1, 1], [], []>} : vector<16x8xf32>, vector<8x128xf32>, vector<16x128xf32> -> vector<16x128xf32>
    %17 = arith.addf %14, %16 : vector<16x128xf32>
    %18 = vector.broadcast %3 : vector<1x128xf32> to vector<16x128xf32>
    %19 = arith.addf %17, %18 : vector<16x128xf32>
    %cst_10 = arith.constant 0.000000e+00 : f32
    %20 = vector.broadcast %cst_10 : f32 to vector<16x128xf32>
    %21 = arith.maximumf %19, %20 : vector<16x128xf32>
    %c0_11 = arith.constant 0 : index
    %c0_12 = arith.constant 0 : index
    %22 = vector.load %arg4[%c0_11, %c0_12] : memref<384x128xf32, #tpu.memory_space<vmem>>, vector<384x128xf32>
    %c0_13 = arith.constant 0 : index
    %c0_14 = arith.constant 0 : index
    %23 = vector.load %arg5[%c0_13, %c0_14] : memref<1x128xf32, #tpu.memory_space<vmem>>, vector<1x128xf32>
    %cst_15 = arith.constant 0.000000e+00 : f32
    %24 = vector.broadcast %cst_15 : f32 to vector<1x128xf32>
    %25 = vector.extract_strided_slice %21 {offsets = [0, 0], sizes = [15, 128], strides = [1, 1]} : vector<16x128xf32> to vector<15x128xf32>
    %26 = tpu.concatenate %24, %25 in 0 : vector<1x128xf32>, vector<15x128xf32> -> vector<16x128xf32>
    %27 = vector.extract_strided_slice %21 {offsets = [1, 0], sizes = [15, 128], strides = [1, 1]} : vector<16x128xf32> to vector<15x128xf32>
    %cst_16 = arith.constant 0.000000e+00 : f32
    %28 = vector.broadcast %cst_16 : f32 to vector<1x128xf32>
    %29 = tpu.concatenate %27, %28 in 0 : vector<15x128xf32>, vector<1x128xf32> -> vector<16x128xf32>
    %30 = vector.extract_strided_slice %22 {offsets = [0, 0], sizes = [128, 128], strides = [1, 1]} : vector<384x128xf32> to vector<128x128xf32>
    %cst_17 = arith.constant dense<0.000000e+00> : vector<16x128xf32>
    %31 = tpu.matmul %26, %30, %cst_17 {dimension_numbers = #tpu.dot_dimension_numbers<[1], [0], [0], [1], [0, 0, 1, 1], [], []>} : vector<16x128xf32>, vector<128x128xf32>, vector<16x128xf32> -> vector<16x128xf32>
    %32 = vector.extract_strided_slice %22 {offsets = [128, 0], sizes = [128, 128], strides = [1, 1]} : vector<384x128xf32> to vector<128x128xf32>
    %cst_18 = arith.constant dense<0.000000e+00> : vector<16x128xf32>
    %33 = tpu.matmul %21, %32, %cst_18 {dimension_numbers = #tpu.dot_dimension_numbers<[1], [0], [0], [1], [0, 0, 1, 1], [], []>} : vector<16x128xf32>, vector<128x128xf32>, vector<16x128xf32> -> vector<16x128xf32>
    %34 = arith.addf %31, %33 : vector<16x128xf32>
    %35 = vector.extract_strided_slice %22 {offsets = [256, 0], sizes = [128, 128], strides = [1, 1]} : vector<384x128xf32> to vector<128x128xf32>
    %cst_19 = arith.constant dense<0.000000e+00> : vector<16x128xf32>
    %36 = tpu.matmul %29, %35, %cst_19 {dimension_numbers = #tpu.dot_dimension_numbers<[1], [0], [0], [1], [0, 0, 1, 1], [], []>} : vector<16x128xf32>, vector<128x128xf32>, vector<16x128xf32> -> vector<16x128xf32>
    %37 = arith.addf %34, %36 : vector<16x128xf32>
    %38 = vector.broadcast %23 : vector<1x128xf32> to vector<16x128xf32>
    %39 = arith.addf %37, %38 : vector<16x128xf32>
    %cst_20 = arith.constant 0.000000e+00 : f32
    %40 = vector.broadcast %cst_20 : f32 to vector<16x128xf32>
    %41 = arith.maximumf %39, %40 : vector<16x128xf32>
    %c0_21 = arith.constant 0 : index
    %c0_22 = arith.constant 0 : index
    %42 = vector.load %arg6[%c0_21, %c0_22] : memref<16x128xf32, #tpu.memory_space<vmem>>, vector<16x128xf32>
    tpu.vector_store %arg6[%c0_21, %c0_22], %41 {strides = array<i32>} : memref<16x128xf32, #tpu.memory_space<vmem>>, vector<16x128xf32>,
    return
  }
  func.func @transform_0(%arg0: i32) -> (i32, i32, i32) {
    %c0_i32 = arith.constant 0 : i32
    %c0_i32_0 = arith.constant 0 : i32
    %c0_i32_1 = arith.constant 0 : i32
    return %arg0, %c0_i32, %c0_i32_0 : i32, i32, i32
  }
  func.func @transform_1(%arg0: i32) -> (i32, i32) {
    %c0_i32 = arith.constant 0 : i32
    %c0_i32_0 = arith.constant 0 : i32
    %c0_i32_1 = arith.constant 0 : i32
    return %c0_i32, %c0_i32_0 : i32, i32
  }
  func.func @transform_2(%arg0: i32) -> (i32, i32) {
    %c0_i32 = arith.constant 0 : i32
    %c0_i32_0 = arith.constant 0 : i32
    %c0_i32_1 = arith.constant 0 : i32
    return %c0_i32, %c0_i32_0 : i32, i32
  }
  func.func @transform_3(%arg0: i32) -> (i32, i32) {
    %c0_i32 = arith.constant 0 : i32
    %c0_i32_0 = arith.constant 0 : i32
    %c0_i32_1 = arith.constant 0 : i32
    return %c0_i32, %c0_i32_0 : i32, i32
  }
  func.func @transform_4(%arg0: i32) -> (i32, i32) {
    %c0_i32 = arith.constant 0 : i32
    %c0_i32_0 = arith.constant 0 : i32
    %c0_i32_1 = arith.constant 0 : i32
    return %c0_i32, %c0_i32_0 : i32, i32
  }
  func.func @transform_5(%arg0: i32) -> (i32, i32) {
    %c0_i32 = arith.constant 0 : i32
    %c0_i32_0 = arith.constant 0 : i32
    return %c0_i32, %arg0 : i32, i32
  }
}

</mosaic_0001>

<llo_original>
// kernel: tpu_custom_call.1
$region0: #{tpu_custom_call.1}
  #allocation0 [shape = 'u32[]', space=smem, size = 0x4, offset = 0x4, fixed_abs, tag = 'smem constant byte address 0x4 - core index']
  #allocation1 [shape = 'u32[144,128]{1,0:T(1,128)}', space=vmem, size = 0x12000, scoped, tag = 'internal scratch']
  %s0 = inlined_call_operand.vmem [shape: f32[2,16,8], index: 0, kind: input, shape index: {}]
  %s1 = inlined_call_operand.vmem [shape: f32[24,128], index: 1, kind: input, shape index: {}]
  %s2 = inlined_call_operand.vmem [shape: f32[1,128], index: 2, kind: input, shape index: {}]
  %s3 = inlined_call_operand.hbm [shape: f32[384,128], index: 3, kind: input, shape index: {}]
  %s4 = inlined_call_operand.vmem [shape: f32[1,128], index: 4, kind: input, shape index: {}]
  %s5 = inlined_call_operand.hbm [shape: f32[16,256], index: 5, kind: output, shape index: {}]
  %s6 = sld [smem:[#allocation0]]
  $region57: #{tpu_custom_call.1} parent=0
    _
  %s8 = ssub.s32 1, %s6
  %s9 = scalar_select 0, %s8, %s6
  $region1: #{tpu_custom_call.1} parent=0
    #allocation2 [shape = 'u8[196608]{0}', space=vmem, size = 0x30000, scoped, tag = 'input window, operand 3, single buffered']
    #allocation3 [shape = 's32[2]{0}', space=sflag, size = 0x8, scoped, tag = 'scoped memory for tpu_custom_call.1']
    #allocation4 [shape = 's32[2]{0}', space=sflag, size = 0x8, scoped, tag = 'scoped memory for tpu_custom_call.1']
    #allocation5 [shape = 'u8[16384]{0}', space=vmem, size = 0x4000, scoped, tag = 'output window, operand 0']
    %10 = vsyncpa [#allocation3], 0
    %11 = vsyncpa [#allocation4], 0
    %s12 = scalar_lea.sflag [#allocation4], 1
    %13 = vsyncpa %s12, 0
    loop: start=0, step=1, limit=4
    $region2: #{tpu_custom_call.1} parent=1 // loop_pre_header
      _
    $region3: #{tpu_custom_call.1} parent=1 // loop_header
      %s15 = sphi 0, %s19
      %p16 = scmp.ge.s32.totalorder %s15, 4
      %s25 = sphi 0, %s27
      %s28 = sphi 0, %s25
      %s29 = sphi 0, %s28
      %s45 = sphi 0, %s29
      %s49 = sphi 0, %s49
      %s51 = sphi 0, %s49
      %s52 = sphi 0, %s51
      %s66 = sphi 0, %s52
      %s70 = sphi 0, %s70
      %s72 = sphi 0, %s70
      %s73 = sphi 0, %s72
      %s87 = sphi 0, %s73
      %s91 = sphi 0, %s91
      %s93 = sphi 0, %s91
      %s94 = sphi 0, %s93
      %s108 = sphi 0, %s94
      %s112 = sphi 0, %s112
      %s114 = sphi 0, %s112
      %s115 = sphi 0, %s114
      %s129 = sphi 0, %s115
      %s135 = sphi 0, %s137
      %s138 = sphi 0, %s135
      %s139 = sphi 0, %s138
      %s155 = sphi 0, %s139
    $region4: #{tpu_custom_call.1} parent=1 // loop_header_branch
      %18 = sbr.rel (%p16) target = $region8
    $region5: #{tpu_custom_call.1} parent=1 // loop_body
      %s20 = ssub.s32 %s15, 1
      %s21 = ssub.s32 %s15, 2
      %s22 = sadd.s32 %s15, 1
      %s23 = ssub.s32 %s15, %s22
      %p24 = scmp.eq.s32.totalorder %s23, 0
      %s26 = sadd.s32 %s25, 1
      %s27 = scalar_select %p24, %s25, %s26
      %p30 = pneg %p24
      %p31 = scmp.eq.s32.totalorder %s15, 1
      %p32 = por %p30, %p31
      %p33 = scmp.ne.s32.totalorder %s25, %s28
      %p34 = scmp.eq.s32.totalorder %s15, 0
      %p35 = por %p33, %p34
      %p36 = scmp.ne.s32.totalorder %s25, %s28
      %p37 = scmp.eq.s32.totalorder %s20, 1
      %p38 = por %p36, %p37
      %p39 = scmp.ne.s32.totalorder %s28, %s29
      %p40 = scmp.eq.s32.totalorder %s20, 0
      %p41 = por %p39, %p40
      %p42 = scmp.ne.s32.totalorder %s28, %s29
      %p43 = scmp.eq.s32.totalorder %s21, 1
      %p44 = por %p42, %p43
      %p46 = scmp.ne.s32.totalorder %s29, %s45
      %p47 = scmp.eq.s32.totalorder %s21, 0
      %p48 = por %p46, %p47
      %s50 = sadd.s32 %s49, 1
      %p53 = scmp.eq.s32.totalorder %s15, 1
      %p54 = scmp.ne.s32.totalorder %s49, %s51
      %p55 = scmp.eq.s32.totalorder %s15, 0
      %p56 = por %p54, %p55
      %p57 = scmp.ne.s32.totalorder %s49, %s51
      %p58 = scmp.eq.s32.totalorder %s20, 1
      %p59 = por %p57, %p58
      %p60 = scmp.ne.s32.totalorder %s51, %s52
      %p61 = scmp.eq.s32.totalorder %s20, 0
      %p62 = por %p60, %p61
      %p63 = scmp.ne.s32.totalorder %s51, %s52
      %p64 = scmp.eq.s32.totalorder %s21, 1
      %p65 = por %p63, %p64
      %p67 = scmp.ne.s32.totalorder %s52, %s66
      %p68 = scmp.eq.s32.totalorder %s21, 0
      %p69 = por %p67, %p68
      %s71 = sadd.s32 %s70, 1
      %p74 = scmp.eq.s32.totalorder %s15, 1
      %p75 = scmp.ne.s32.totalorder %s70, %s72
      %p76 = scmp.eq.s32.totalorder %s15, 0
      %p77 = por %p75, %p76
      %p78 = scmp.ne.s32.totalorder %s70, %s72
      %p79 = scmp.eq.s32.totalorder %s20, 1
      %p80 = por %p78, %p79
      %p81 = scmp.ne.s32.totalorder %s72, %s73
      %p82 = scmp.eq.s32.totalorder %s20, 0
      %p83 = por %p81, %p82
      %p84 = scmp.ne.s32.totalorder %s72, %s73
      %p85 = scmp.eq.s32.totalorder %s21, 1
      %p86 = por %p84, %p85
      %p88 = scmp.ne.s32.totalorder %s73, %s87
      %p89 = scmp.eq.s32.totalorder %s21, 0
      %p90 = por %p88, %p89
      %s92 = sadd.s32 %s91, 1
      %p95 = scmp.eq.s32.totalorder %s15, 1
      %p96 = scmp.ne.s32.totalorder %s91, %s93
      %p97 = scmp.eq.s32.totalorder %s15, 0
      %p98 = por %p96, %p97
      %p99 = scmp.ne.s32.totalorder %s91, %s93
      %p100 = scmp.eq.s32.totalorder %s20, 1
      %p101 = por %p99, %p100
      %p102 = scmp.ne.s32.totalorder %s93, %s94
      %p103 = scmp.eq.s32.totalorder %s20, 0
      %p104 = por %p102, %p103
      %p105 = scmp.ne.s32.totalorder %s93, %s94
      %p106 = scmp.eq.s32.totalorder %s21, 1
      %p107 = por %p105, %p106
      %p109 = scmp.ne.s32.totalorder %s94, %s108
      %p110 = scmp.eq.s32.totalorder %s21, 0
      %p111 = por %p109, %p110
      %s113 = sadd.s32 %s112, 1
      %p116 = scmp.eq.s32.totalorder %s15, 1
      %p117 = scmp.ne.s32.totalorder %s112, %s114
      %p118 = scmp.eq.s32.totalorder %s15, 0
      %p119 = por %p117, %p118
      %p120 = scmp.ne.s32.totalorder %s112, %s114
      %p121 = scmp.eq.s32.totalorder %s20, 1
      %p122 = por %p120, %p121
      %p123 = scmp.ne.s32.totalorder %s114, %s115
      %p124 = scmp.eq.s32.totalorder %s20, 0
      %p125 = por %p123, %p124
      %p126 = scmp.ne.s32.totalorder %s114, %s115
      %p127 = scmp.eq.s32.totalorder %s21, 1
      %p128 = por %p126, %p127
      %p130 = scmp.ne.s32.totalorder %s115, %s129
      %p131 = scmp.eq.s32.totalorder %s21, 0
      %p132 = por %p130, %p131
      %s133 = ssub.s32 %s15, %s22
      %p134 = scmp.eq.s32.totalorder %s133, 0
      %s136 = sadd.s32 %s135, 1
      %s137 = scalar_select %p134, %s135, %s136
      %p140 = pneg %p134
      %p141 = scmp.eq.s32.totalorder %s15, 1
      %p142 = por %p140, %p141
      %p143 = scmp.ne.s32.totalorder %s135, %s138
      %p144 = scmp.eq.s32.totalorder %s15, 0
      %p145 = por %p143, %p144
      %p146 = scmp.ne.s32.totalorder %s135, %s138
      %p147 = scmp.eq.s32.totalorder %s20, 1
      %p148 = por %p146, %p147
      %p149 = scmp.ne.s32.totalorder %s138, %s139
      %p150 = scmp.eq.s32.totalorder %s20, 0
      %p151 = por %p149, %p150
      %p152 = scmp.ne.s32.totalorder %s138, %s139
      %p153 = scmp.eq.s32.totalorder %s21, 1
      %p154 = por %p152, %p153
      %p156 = scmp.ne.s32.totalorder %s139, %s155
      %p157 = scmp.eq.s32.totalorder %s21, 0
      %p158 = por %p156, %p157
      %p159 = scmp.le.s32.totalorder 1, %s15
      %p160 = scmp.lt.s32.totalorder %s15, 3
      %p161 = pnand %p159, %p160
      %p162 = pneg %p161
      // Predicated region
      $region9: #{tpu_custom_call.1} parent=5 // pred_check
        _
      $region10: #{tpu_custom_call.1} parent=5 // pred_check_branch
        %164 = sbr.rel (%p161) target = $region12
      $region11: #{tpu_custom_call.1} parent=5 // pred_region
        %s165 = ssub.s32 %s15, 1
        // Predicated region
        $region13: #{tpu_custom_call.1} parent=11 // pred_check
          %p166 = pneg %p62
        $region14: #{tpu_custom_call.1} parent=11 // pred_check_branch
          %168 = sbr.rel (%p166) target = $region16
        $region15: #{tpu_custom_call.1} parent=11 // pred_region
          _
        $region16: #{tpu_custom_call.1} parent=11 // pred_fallthru
          _
        // Predicated region
        $region17: #{tpu_custom_call.1} parent=11 // pred_check
          %p169 = pneg %p83
        $region18: #{tpu_custom_call.1} parent=11 // pred_check_branch
          %171 = sbr.rel (%p169) target = $region20
        $region19: #{tpu_custom_call.1} parent=11 // pred_region
          _
        $region20: #{tpu_custom_call.1} parent=11 // pred_fallthru
          _
        // Predicated region
        $region21: #{tpu_custom_call.1} parent=11 // pred_check
          %p172 = pneg %p104
        $region22: #{tpu_custom_call.1} parent=11 // pred_check_branch
          %174 = sbr.rel (%p172) target = $region24
        $region23: #{tpu_custom_call.1} parent=11 // pred_region
          %s176 = ssub.s32 6144, 6144
          %177 = vsyncadd [#allocation3], %s176
          %s178 = sshll.u32 [#allocation2], 4
          %s179 = int_to_ptr.vmem [resolvable:$true] %s178
          %184 = dma.hbm_to_vmem [thread:$0]  %s3, 6144, %s179, [#allocation3], 128, 128, 8
        $region24: #{tpu_custom_call.1} parent=11 // pred_fallthru
          _
        // Predicated region
        $region25: #{tpu_custom_call.1} parent=11 // pred_check
          %p185 = pneg %p125
        $region26: #{tpu_custom_call.1} parent=11 // pred_check_branch
          %187 = sbr.rel (%p185) target = $region28
        $region27: #{tpu_custom_call.1} parent=11 // pred_region
          _
        $region28: #{tpu_custom_call.1} parent=11 // pred_fallthru
          _
      $region12: #{tpu_custom_call.1} parent=5 // pred_fallthru
        _
      %p188 = scmp.lt.s32.totalorder %s15, 2
      // Predicated region
      $region29: #{tpu_custom_call.1} parent=5 // pred_check
        %p189 = pneg %p188
      $region30: #{tpu_custom_call.1} parent=5 // pred_check_branch
        %191 = sbr.rel (%p189) target = $region32
      $region31: #{tpu_custom_call.1} parent=5 // pred_region
        // Predicated region
        $region33: #{tpu_custom_call.1} parent=31 // pred_check
          %p192 = pneg %p35
        $region34: #{tpu_custom_call.1} parent=31 // pred_check_branch
          %194 = sbr.rel (%p192) target = $region36
        $region35: #{tpu_custom_call.1} parent=31 // pred_region
          %p195 = scmp.lt.s32.totalorder %s15, 1
          %s196 = scalar_select %p195, %s15, 1
          %s197 = smul.addr %s196, 2
          %s198 = smul.addr %s197, 8
          %s199 = scalar_lea.vmem %s0, %s198
        $region36: #{tpu_custom_call.1} parent=31 // pred_fallthru
          _
      $region32: #{tpu_custom_call.1} parent=5 // pred_fallthru
        _
      %p200 = scmp.le.s32.totalorder 1, %s15
      %p201 = scmp.lt.s32.totalorder %s15, 3
      %p202 = pnand %p200, %p201
      %p203 = pneg %p202
      // Predicated region
      $region37: #{tpu_custom_call.1} parent=5 // pred_check
        _
      $region38: #{tpu_custom_call.1} parent=5 // pred_check_branch
        %205 = sbr.rel (%p202) target = $region40
      $region39: #{tpu_custom_call.1} parent=5 // pred_region
        %s206 = ssub.s32 %s15, 1
        // Predicated region
        $region41: #{tpu_custom_call.1} parent=39 // pred_check
          %p207 = pneg %p104
        $region42: #{tpu_custom_call.1} parent=39 // pred_check_branch
          %209 = sbr.rel (%p207) target = $region44
        $region43: #{tpu_custom_call.1} parent=39 // pred_region
          %210 = dma.done [#allocation3], 6144
        $region44: #{tpu_custom_call.1} parent=39 // pred_fallthru
          _
        %p211 = scmp.lt.s32.totalorder %s20, 1
        %s212 = scalar_select %p211, %s20, 1
        %s213 = smul.addr %s212, 2
        %s214 = smul.addr %s213, 8
        %s215 = scalar_lea.vmem %s0, %s214
        %p216 = pneg %p41
        %p217 = pneg %p38
        %p218 = pneg %p62
        %p219 = pneg %p59
        %p220 = pneg %p83
        %p221 = pneg %p80
        %p222 = pneg %p104
        %p223 = pneg %p101
        %p224 = pneg %p125
        %p225 = pneg %p122
        %p226 = pneg %p151
        %p227 = pneg %p148
        %s228 = sand.u32 %s138, 1
        %s229 = scalar_lea.sflag [#allocation4], %s228
        %s230 = sand.u32 %s138, 1
        %s231 = smul.addr %s230, 16
        %s232 = scalar_lea.vmem [#allocation5], %s231
        %p233 = scmp.lt.s32.totalorder %s20, 1
        %s234 = scalar_select %p233, %s20, 1
        %s235 = smul.addr %s234, 2
        %s236 = smul.addr %s235, 8
        %s237 = scalar_lea.vmem %s0, %s236
        %v238 = vld [vmem:[%s237] sm:$0xff]
        %v239 = vld [vmem:[%s237 + $0x8] sm:$0xff]
        %v240 = vld [vmem:[%s1] sm:$0xff]
        %v241 = vld [vmem:[%s1 + $0x8] sm:$0xff]
        %v242 = vld [vmem:[%s1 + $0x10] sm:$0xff]
        %v243 = vld [vmem:[%s2] sm:$0x1]
        %vm246 = vcmask 1040384
        %v247 = vrot.slane %v238, 7
        %v248 = vrot.slane %v239, 7
        %v249 = vsel %vm246, %v247, %v248
        %v251 = vsel %vm246, 0.0, %v247
        %vm252 = vcmask 1046528
        %v253 = vrot.slane %v238, 1
        %v254 = vrot.slane %v239, 1
        %v255 = vsel %vm252, %v253, %v254
        %v257 = vsel %vm252, %v254, 0.0
        %vm258 = vcmask 64512
        %v259 = vsel %vm258, %v238, 0
        %v261 = vsel %vm258, %v239, 0
        %263 = vmatprep.subr.mxu0 0.0
        %264 = vmatpush1.msra.mxu0 0.0
        %265 = vmatprep.subr.mxu0 0.0
        %266 = vmatpush1.msra.mxu0 0.0
        %267 = vmatprep.subr.mxu0 0.0
        %268 = vmatpush1.msra.mxu0 0.0
        %269 = vmatprep.subr.mxu0 0.0
        %270 = vmatpush1.msra.mxu0 0.0
        %271 = vmatprep.subr.mxu0 0.0
        %272 = vmatpush1.msra.mxu0 0.0
        %273 = vmatprep.subr.mxu0 0.0
        %274 = vmatpush1.msra.mxu0 0.0
        %275 = vmatprep.subr.mxu0 0.0
        %276 = vmatpush1.msra.mxu0 0.0
        %277 = vmatprep.subr.mxu0 0.0
        %278 = vmatpush1.msra.mxu0 0.0
        %279 = vmatprep.subr.mxu0 0.0
        %280 = vmatpush1.msra.mxu0 0.0
        %281 = vmatprep.subr.mxu0 0.0
        %282 = vmatpush1.msra.mxu0 0.0
        %283 = vmatprep.subr.mxu0 0.0
        %284 = vmatpush1.msra.mxu0 0.0
        %285 = vmatprep.subr.mxu0 0.0
        %286 = vmatpush1.msra.mxu0 0.0
        %287 = vmatprep.subr.mxu0 0.0
        %288 = vmatpush1.msra.mxu0 0.0
        %289 = vmatprep.subr.mxu0 0.0
        %290 = vmatpush1.msra.mxu0 0.0
        %291 = vmatprep.subr.mxu0 0.0
        %292 = vmatpush1.msra.mxu0 0.0
        %293 = vmatprep.subr.mxu0 0.0
        %294 = vmatpush1.msra.mxu0 %v241
        %295 = vmatprep.subr.mxu0 0.0
        %296 = vmatpush2.msra.mxu0 0.0
        %297 = vmatprep.subr.mxu0 0.0
        %298 = vmatpush2.msra.mxu0 0.0
        %299 = vmatprep.subr.mxu0 0.0
        %300 = vmatpush2.msra.mxu0 0.0
        %301 = vmatprep.subr.mxu0 0.0
        %302 = vmatpush2.msra.mxu0 0.0
        %303 = vmatprep.subr.mxu0 0.0
        %304 = vmatpush2.msra.mxu0 0.0
        %305 = vmatprep.subr.mxu0 0.0
        %306 = vmatpush2.msra.mxu0 0.0
        %307 = vmatprep.subr.mxu0 0.0
        %308 = vmatpush2.msra.mxu0 0.0
        %309 = vmatprep.subr.mxu0 0.0
        %310 = vmatpush2.msra.mxu0 0.0
        %311 = vmatprep.subr.mxu0 0.0
        %312 = vmatpush2.msra.mxu0 0.0
        %313 = vmatprep.subr.mxu0 0.0
        %314 = vmatpush2.msra.mxu0 0.0
        %315 = vmatprep.subr.mxu0 0.0
        %316 = vmatpush2.msra.mxu0 0.0
        %317 = vmatprep.subr.mxu0 0.0
        %318 = vmatpush2.msra.mxu0 0.0
        %319 = vmatprep.subr.mxu0 0.0
        %320 = vmatpush2.msra.mxu0 0.0
        %321 = vmatprep.subr.mxu0 0.0
        %322 = vmatpush2.msra.mxu0 0.0
        %323 = vmatprep.subr.mxu0 0.0
        %324 = vmatpush2.msra.mxu0 0.0
        %325 = vmatprep.subr.mxu0 0.0
        %326 = vmatpush2.msra.mxu0 0.0
        %327 = vmatprep.mubr.f32.mxu0 0.0
        %328 = vmatmul.mubr.f32.gmra.mxu0 %v259
        %v329 = vpop.f32.mrf.mxu0
        %v330 = vadd.f32 0.0, %v329
        %v331 = vpop.f32.mrf.mxu0
        %332 = vmatprep.mubr.f32.mxu0 0.0
        %333 = vmatmul.mubr.f32.gmra.mxu0 %v261
        %v334 = vpop.f32.mrf.mxu0
        %v335 = vadd.f32 0.0, %v334
        %v336 = vpop.f32.mrf.mxu0
        %337 = vdwg.mxu0
        %v339 = vsel %vm258, %v251, 0
        %v341 = vsel %vm258, %v249, 0
        %343 = vmatprep.subr.mxu0 0.0
        %344 = vmatpush1.msra.mxu0 0.0
        %345 = vmatprep.subr.mxu0 0.0
        %346 = vmatpush1.msra.mxu0 0.0
        %347 = vmatprep.subr.mxu0 0.0
        %348 = vmatpush1.msra.mxu0 0.0
        %349 = vmatprep.subr.mxu0 0.0
        %350 = vmatpush1.msra.mxu0 0.0
        %351 = vmatprep.subr.mxu0 0.0
        %352 = vmatpush1.msra.mxu0 0.0
        %353 = vmatprep.subr.mxu0 0.0
        %354 = vmatpush1.msra.mxu0 0.0
        %355 = vmatprep.subr.mxu0 0.0
        %356 = vmatpush1.msra.mxu0 0.0
        %357 = vmatprep.subr.mxu0 0.0
        %358 = vmatpush1.msra.mxu0 0.0
        %359 = vmatprep.subr.mxu0 0.0
        %360 = vmatpush1.msra.mxu0 0.0
        %361 = vmatprep.subr.mxu0 0.0
        %362 = vmatpush1.msra.mxu0 0.0
        %363 = vmatprep.subr.mxu0 0.0
        %364 = vmatpush1.msra.mxu0 0.0
        %365 = vmatprep.subr.mxu0 0.0
        %366 = vmatpush1.msra.mxu0 0.0
        %367 = vmatprep.subr.mxu0 0.0
        %368 = vmatpush1.msra.mxu0 0.0
        %369 = vmatprep.subr.mxu0 0.0
        %370 = vmatpush1.msra.mxu0 0.0
        %371 = vmatprep.subr.mxu0 0.0
        %372 = vmatpush1.msra.mxu0 0.0
        %373 = vmatprep.subr.mxu0 0.0
        %374 = vmatpush1.msra.mxu0 %v240
        %375 = vmatprep.subr.mxu0 0.0
        %376 = vmatpush2.msra.mxu0 0.0
        %377 = vmatprep.subr.mxu0 0.0
        %378 = vmatpush2.msra.mxu0 0.0
        %379 = vmatprep.subr.mxu0 0.0
        %380 = vmatpush2.msra.mxu0 0.0
        %381 = vmatprep.subr.mxu0 0.0
        %382 = vmatpush2.msra.mxu0 0.0
        %383 = vmatprep.subr.mxu0 0.0
        %384 = vmatpush2.msra.mxu0 0.0
        %385 = vmatprep.subr.mxu0 0.0
        %386 = vmatpush2.msra.mxu0 0.0
        %387 = vmatprep.subr.mxu0 0.0
        %388 = vmatpush2.msra.mxu0 0.0
        %389 = vmatprep.subr.mxu0 0.0
        %390 = vmatpush2.msra.mxu0 0.0
        %391 = vmatprep.subr.mxu0 0.0
        %392 = vmatpush2.msra.mxu0 0.0
        %393 = vmatprep.subr.mxu0 0.0
        %394 = vmatpush2.msra.mxu0 0.0
        %395 = vmatprep.subr.mxu0 0.0
        %396 = vmatpush2.msra.mxu0 0.0
        %397 = vmatprep.subr.mxu0 0.0
        %398 = vmatpush2.msra.mxu0 0.0
        %399 = vmatprep.subr.mxu0 0.0
        %400 = vmatpush2.msra.mxu0 0.0
        %401 = vmatprep.subr.mxu0 0.0
        %402 = vmatpush2.msra.mxu0 0.0
        %403 = vmatprep.subr.mxu0 0.0
        %404 = vmatpush2.msra.mxu0 0.0
        %405 = vmatprep.subr.mxu0 0.0
        %406 = vmatpush2.msra.mxu0 0.0
        %407 = vmatprep.mubr.f32.mxu0 0.0
        %408 = vmatmul.mubr.f32.gmra.mxu0 %v339
        %v409 = vpop.f32.mrf.mxu0
        %v410 = vadd.f32 %v330, %v409
        %v411 = vpop.f32.mrf.mxu0
        %412 = vmatprep.mubr.f32.mxu0 0.0
        %413 = vmatmul.mubr.f32.gmra.mxu0 %v341
        %v414 = vpop.f32.mrf.mxu0
        %v415 = vadd.f32 %v335, %v414
        %v416 = vpop.f32.mrf.mxu0
        %417 = vdwg.mxu0
        %v418 = vsel %vm258, %v255, 0
        %v421 = vsel %vm258, %v257, 0
        %423 = vmatprep.subr.mxu0 0.0
        %424 = vmatpush1.msra.mxu0 0.0
        %425 = vmatprep.subr.mxu0 0.0
        %426 = vmatpush1.msra.mxu0 0.0
        %427 = vmatprep.subr.mxu0 0.0
        %428 = vmatpush1.msra.mxu0 0.0
        %429 = vmatprep.subr.mxu0 0.0
        %430 = vmatpush1.msra.mxu0 0.0
        %431 = vmatprep.subr.mxu0 0.0
        %432 = vmatpush1.msra.mxu0 0.0
        %433 = vmatprep.subr.mxu0 0.0
        %434 = vmatpush1.msra.mxu0 0.0
        %435 = vmatprep.subr.mxu0 0.0
        %436 = vmatpush1.msra.mxu0 0.0
        %437 = vmatprep.subr.mxu0 0.0
        %438 = vmatpush1.msra.mxu0 0.0
        %439 = vmatprep.subr.mxu0 0.0
        %440 = vmatpush1.msra.mxu0 0.0
        %441 = vmatprep.subr.mxu0 0.0
        %442 = vmatpush1.msra.mxu0 0.0
        %443 = vmatprep.subr.mxu0 0.0
        %444 = vmatpush1.msra.mxu0 0.0
        %445 = vmatprep.subr.mxu0 0.0
        %446 = vmatpush1.msra.mxu0 0.0
        %447 = vmatprep.subr.mxu0 0.0
        %448 = vmatpush1.msra.mxu0 0.0
        %449 = vmatprep.subr.mxu0 0.0
        %450 = vmatpush1.msra.mxu0 0.0
        %451 = vmatprep.subr.mxu0 0.0
        %452 = vmatpush1.msra.mxu0 0.0
        %453 = vmatprep.subr.mxu0 0.0
        %454 = vmatpush1.msra.mxu0 %v242
        %455 = vmatprep.subr.mxu0 0.0
        %456 = vmatpush2.msra.mxu0 0.0
        %457 = vmatprep.subr.mxu0 0.0
        %458 = vmatpush2.msra.mxu0 0.0
        %459 = vmatprep.subr.mxu0 0.0
        %460 = vmatpush2.msra.mxu0 0.0
        %461 = vmatprep.subr.mxu0 0.0
        %462 = vmatpush2.msra.mxu0 0.0
        %463 = vmatprep.subr.mxu0 0.0
        %464 = vmatpush2.msra.mxu0 0.0
        %465 = vmatprep.subr.mxu0 0.0
        %466 = vmatpush2.msra.mxu0 0.0
        %467 = vmatprep.subr.mxu0 0.0
        %468 = vmatpush2.msra.mxu0 0.0
        %469 = vmatprep.subr.mxu0 0.0
        %470 = vmatpush2.msra.mxu0 0.0
        %471 = vmatprep.subr.mxu0 0.0
        %472 = vmatpush2.msra.mxu0 0.0
        %473 = vmatprep.subr.mxu0 0.0
        %474 = vmatpush2.msra.mxu0 0.0
        %475 = vmatprep.subr.mxu0 0.0
        %476 = vmatpush2.msra.mxu0 0.0
        %477 = vmatprep.subr.mxu0 0.0
        %478 = vmatpush2.msra.mxu0 0.0
        %479 = vmatprep.subr.mxu0 0.0
        %480 = vmatpush2.msra.mxu0 0.0
        %481 = vmatprep.subr.mxu0 0.0
        %482 = vmatpush2.msra.mxu0 0.0
        %483 = vmatprep.subr.mxu0 0.0
        %484 = vmatpush2.msra.mxu0 0.0
        %485 = vmatprep.subr.mxu0 0.0
        %486 = vmatpush2.msra.mxu0 0.0
        %487 = vmatprep.mubr.f32.mxu0 0.0
        %488 = vmatmul.mubr.f32.gmra.mxu0 %v418
        %v489 = vpop.f32.mrf.mxu0
        %v490 = vadd.f32 0.0, %v489
        %v491 = vpop.f32.mrf.mxu0
        %492 = vmatprep.mubr.f32.mxu0 0.0
        %493 = vmatmul.mubr.f32.gmra.mxu0 %v421
        %v494 = vpop.f32.mrf.mxu0
        %v495 = vadd.f32 0.0, %v494
        %v496 = vpop.f32.mrf.mxu0
        %497 = vdwg.mxu0
        %v498 = vadd.f32 %v410, %v490
        %v499 = vadd.f32 %v415, %v495
        %v501 = vlaneseq
        %v502 = vshrl.u32 %v501, 7
        %v503 = vsub.s32 0, %v502
        %v504 = vrot.slane %v243, %v503
        %v506 = vadd.f32 %v498, %v504
        %v507 = vadd.f32 %v499, %v504
        %v508 = vmax.f32 %v506, 0.0
        %v509 = vmax.f32 %v507, 0.0
        %v510 = vld [vmem:[#allocation2] sm:$0xff]
        %v511 = vld [vmem:[#allocation2 + $0x8] sm:$0xff]
        %v512 = vld [vmem:[#allocation2 + $0x10] sm:$0xff]
        %v513 = vld [vmem:[#allocation2 + $0x18] sm:$0xff]
        %v514 = vld [vmem:[#allocation2 + $0x20] sm:$0xff]
        %v515 = vld [vmem:[#allocation2 + $0x28] sm:$0xff]
        %v516 = vld [vmem:[#allocation2 + $0x30] sm:$0xff]
        %v517 = vld [vmem:[#allocation2 + $0x38] sm:$0xff]
        %v518 = vld [vmem:[#allocation2 + $0x40] sm:$0xff]
        %v519 = vld [vmem:[#allocation2 + $0x48] sm:$0xff]
        %v520 = vld [vmem:[#allocation2 + $0x50] sm:$0xff]
        %v521 = vld [vmem:[#allocation2 + $0x58] sm:$0xff]
        %v522 = vld [vmem:[#allocation2 + $0x60] sm:$0xff]
        %v523 = vld [vmem:[#allocation2 + $0x68] sm:$0xff]
        %v524 = vld [vmem:[#allocation2 + $0x70] sm:$0xff]
        %v525 = vld [vmem:[#allocation2 + $0x78] sm:$0xff]
        %v526 = vld [vmem:[#allocation2 + $0x80] sm:$0xff]
        %v527 = vld [vmem:[#allocation2 + $0x88] sm:$0xff]
        %v528 = vld [vmem:[#allocation2 + $0x90] sm:$0xff]
        %v529 = vld [vmem:[#allocation2 + $0x98] sm:$0xff]
        %v530 = vld [vmem:[#allocation2 + $0xa0] sm:$0xff]
        %v531 = vld [vmem:[#allocation2 + $0xa8] sm:$0xff]
        %v532 = vld [vmem:[#allocation2 + $0xb0] sm:$0xff]
        %v533 = vld [vmem:[#allocation2 + $0xb8] sm:$0xff]
        %v534 = vld [vmem:[#allocation2 + $0xc0] sm:$0xff]
        %v535 = vld [vmem:[#allocation2 + $0xc8] sm:$0xff]
        %v536 = vld [vmem:[#allocation2 + $0xd0] sm:$0xff]
        %v537 = vld [vmem:[#allocation2 + $0xd8] sm:$0xff]
        %v538 = vld [vmem:[#allocation2 + $0xe0] sm:$0xff]
        %v539 = vld [vmem:[#allocation2 + $0xe8] sm:$0xff]
        %v540 = vld [vmem:[#allocation2 + $0xf0] sm:$0xff]
        %v541 = vld [vmem:[#allocation2 + $0xf8] sm:$0xff]
        %v542 = vld [vmem:[#allocation2 + $0x100] sm:$0xff]
        %v543 = vld [vmem:[#allocation2 + $0x108] sm:$0xff]
        %v544 = vld [vmem:[#allocation2 + $0x110] sm:$0xff]
        %v545 = vld [vmem:[#allocation2 + $0x118] sm:$0xff]
        %v546 = vld [vmem:[#allocation2 + $0x120] sm:$0xff]
        %v547 = vld [vmem:[#allocation2 + $0x128] sm:$0xff]
        %v548 = vld [vmem:[#allocation2 + $0x130] sm:$0xff]
        %v549 = vld [vmem:[#allocation2 + $0x138] sm:$0xff]
        %v550 = vld [vmem:[#allocation2 + $0x140] sm:$0xff]
        %v551 = vld [vmem:[#allocation2 + $0x148] sm:$0xff]
        %v552 = vld [vmem:[#allocation2 + $0x150] sm:$0xff]
        %v553 = vld [vmem:[#allocation2 + $0x158] sm:$0xff]
        %v554 = vld [vmem:[#allocation2 + $0x160] sm:$0xff]
        %v555 = vld [vmem:[#allocation2 + $0x168] sm:$0xff]
        %v556 = vld [vmem:[#allocation2 + $0x170] sm:$0xff]
        %v557 = vld [vmem:[#allocation2 + $0x178] sm:$0xff]
        %v558 = vld [vmem:[%s4] sm:$0x1]
        %v561 = vrot.slane %v508, 7
        %v562 = vrot.slane %v509, 7
        %v563 = vsel %vm246, %v561, %v562
        %v566 = vsel %vm246, 0.0, %v561
        %v567 = vrot.slane %v508, 1
        %v568 = vrot.slane %v509, 1
        %v569 = vsel %vm252, %v567, %v568
        %v572 = vsel %vm252, %v568, 0.0
        %573 = vmatprep.subr.mxu0 0.0
        %574 = vmatpush1.msra.mxu0 %v541
        %575 = vmatprep.subr.mxu0 0.0
        %576 = vmatpush1.msra.mxu0 %v540
        %577 = vmatprep.subr.mxu0 0.0
        %578 = vmatpush1.msra.mxu0 %v539
        %579 = vmatprep.subr.mxu0 0.0
        %580 = vmatpush1.msra.mxu0 %v538
        %581 = vmatprep.subr.mxu0 0.0
        %582 = vmatpush1.msra.mxu0 %v537
        %583 = vmatprep.subr.mxu0 0.0
        %584 = vmatpush1.msra.mxu0 %v536
        %585 = vmatprep.subr.mxu0 0.0
        %586 = vmatpush1.msra.mxu0 %v535
        %587 = vmatprep.subr.mxu0 0.0
        %588 = vmatpush1.msra.mxu0 %v534
        %589 = vmatprep.subr.mxu0 0.0
        %590 = vmatpush1.msra.mxu0 %v533
        %591 = vmatprep.subr.mxu0 0.0
        %592 = vmatpush1.msra.mxu0 %v532
        %593 = vmatprep.subr.mxu0 0.0
        %594 = vmatpush1.msra.mxu0 %v531
        %595 = vmatprep.subr.mxu0 0.0
        %596 = vmatpush1.msra.mxu0 %v530
        %597 = vmatprep.subr.mxu0 0.0
        %598 = vmatpush1.msra.mxu0 %v529
        %599 = vmatprep.subr.mxu0 0.0
        %600 = vmatpush1.msra.mxu0 %v528
        %601 = vmatprep.subr.mxu0 0.0
        %602 = vmatpush1.msra.mxu0 %v527
        %603 = vmatprep.subr.mxu0 0.0
        %604 = vmatpush1.msra.mxu0 %v526
        %605 = vmatprep.subr.mxu0 0.0
        %606 = vmatpush2.msra.mxu0 0.0
        %607 = vmatprep.subr.mxu0 0.0
        %608 = vmatpush2.msra.mxu0 0.0
        %609 = vmatprep.subr.mxu0 0.0
        %610 = vmatpush2.msra.mxu0 0.0
        %611 = vmatprep.subr.mxu0 0.0
        %612 = vmatpush2.msra.mxu0 0.0
        %613 = vmatprep.subr.mxu0 0.0
        %614 = vmatpush2.msra.mxu0 0.0
        %615 = vmatprep.subr.mxu0 0.0
        %616 = vmatpush2.msra.mxu0 0.0
        %617 = vmatprep.subr.mxu0 0.0
        %618 = vmatpush2.msra.mxu0 0.0
        %619 = vmatprep.subr.mxu0 0.0
        %620 = vmatpush2.msra.mxu0 0.0
        %621 = vmatprep.subr.mxu0 0.0
        %622 = vmatpush2.msra.mxu0 0.0
        %623 = vmatprep.subr.mxu0 0.0
        %624 = vmatpush2.msra.mxu0 0.0
        %625 = vmatprep.subr.mxu0 0.0
        %626 = vmatpush2.msra.mxu0 0.0
        %627 = vmatprep.subr.mxu0 0.0
        %628 = vmatpush2.msra.mxu0 0.0
        %629 = vmatprep.subr.mxu0 0.0
        %630 = vmatpush2.msra.mxu0 0.0
        %631 = vmatprep.subr.mxu0 0.0
        %632 = vmatpush2.msra.mxu0 0.0
        %633 = vmatprep.subr.mxu0 0.0
        %634 = vmatpush2.msra.mxu0 0.0
        %635 = vmatprep.subr.mxu0 0.0
        %636 = vmatpush2.msra.mxu0 0.0
        %637 = vmatprep.mubr.f32.mxu0 0.0
        %638 = vmatmul.mubr.f32.gmra.mxu0 %v508
        %v639 = vpop.f32.mrf.mxu0
        %v640 = vadd.f32 0.0, %v639
        %v641 = vpop.f32.mrf.mxu0
        %642 = vmatprep.mubr.f32.mxu0 0.0
        %643 = vmatmul.mubr.f32.gmra.mxu0 %v509
        %v644 = vpop.f32.mrf.mxu0
        %v645 = vadd.f32 0.0, %v644
        %v646 = vpop.f32.mrf.mxu0
        %647 = vdwg.mxu0
        %648 = vmatprep.subr.mxu0 0.0
        %649 = vmatpush1.msra.mxu0 %v525
        %650 = vmatprep.subr.mxu0 0.0
        %651 = vmatpush1.msra.mxu0 %v524
        %652 = vmatprep.subr.mxu0 0.0
        %653 = vmatpush1.msra.mxu0 %v523
        %654 = vmatprep.subr.mxu0 0.0
        %655 = vmatpush1.msra.mxu0 %v522
        %656 = vmatprep.subr.mxu0 0.0
        %657 = vmatpush1.msra.mxu0 %v521
        %658 = vmatprep.subr.mxu0 0.0
        %659 = vmatpush1.msra.mxu0 %v520
        %660 = vmatprep.subr.mxu0 0.0
        %661 = vmatpush1.msra.mxu0 %v519
        %662 = vmatprep.subr.mxu0 0.0
        %663 = vmatpush1.msra.mxu0 %v518
        %664 = vmatprep.subr.mxu0 0.0
        %665 = vmatpush1.msra.mxu0 %v517
        %666 = vmatprep.subr.mxu0 0.0
        %667 = vmatpush1.msra.mxu0 %v516
        %668 = vmatprep.subr.mxu0 0.0
        %669 = vmatpush1.msra.mxu0 %v515
        %670 = vmatprep.subr.mxu0 0.0
        %671 = vmatpush1.msra.mxu0 %v514
        %672 = vmatprep.subr.mxu0 0.0
        %673 = vmatpush1.msra.mxu0 %v513
        %674 = vmatprep.subr.mxu0 0.0
        %675 = vmatpush1.msra.mxu0 %v512
        %676 = vmatprep.subr.mxu0 0.0
        %677 = vmatpush1.msra.mxu0 %v511
        %678 = vmatprep.subr.mxu0 0.0
        %679 = vmatpush1.msra.mxu0 %v510
        %680 = vmatprep.subr.mxu0 0.0
        %681 = vmatpush2.msra.mxu0 0.0
        %682 = vmatprep.subr.mxu0 0.0
        %683 = vmatpush2.msra.mxu0 0.0
        %684 = vmatprep.subr.mxu0 0.0
        %685 = vmatpush2.msra.mxu0 0.0
        %686 = vmatprep.subr.mxu0 0.0
        %687 = vmatpush2.msra.mxu0 0.0
        %688 = vmatprep.subr.mxu0 0.0
        %689 = vmatpush2.msra.mxu0 0.0
        %690 = vmatprep.subr.mxu0 0.0
        %691 = vmatpush2.msra.mxu0 0.0
        %692 = vmatprep.subr.mxu0 0.0
        %693 = vmatpush2.msra.mxu0 0.0
        %694 = vmatprep.subr.mxu0 0.0
        %695 = vmatpush2.msra.mxu0 0.0
        %696 = vmatprep.subr.mxu0 0.0
        %697 = vmatpush2.msra.mxu0 0.0
        %698 = vmatprep.subr.mxu0 0.0
        %699 = vmatpush2.msra.mxu0 0.0
        %700 = vmatprep.subr.mxu0 0.0
        %701 = vmatpush2.msra.mxu0 0.0
        %702 = vmatprep.subr.mxu0 0.0
        %703 = vmatpush2.msra.mxu0 0.0
        %704 = vmatprep.subr.mxu0 0.0
        %705 = vmatpush2.msra.mxu0 0.0
        %706 = vmatprep.subr.mxu0 0.0
        %707 = vmatpush2.msra.mxu0 0.0
        %708 = vmatprep.subr.mxu0 0.0
        %709 = vmatpush2.msra.mxu0 0.0
        %710 = vmatprep.subr.mxu0 0.0
        %711 = vmatpush2.msra.mxu0 0.0
        %712 = vmatprep.mubr.f32.mxu0 0.0
        %713 = vmatmul.mubr.f32.gmra.mxu0 %v566
        %v714 = vpop.f32.mrf.mxu0
        %v715 = vadd.f32 %v640, %v714
        %v716 = vpop.f32.mrf.mxu0
        %717 = vmatprep.mubr.f32.mxu0 0.0
        %718 = vmatmul.mubr.f32.gmra.mxu0 %v563
        %v719 = vpop.f32.mrf.mxu0
        %v720 = vadd.f32 %v645, %v719
        %v721 = vpop.f32.mrf.mxu0
        %722 = vdwg.mxu0
        %723 = vmatprep.subr.mxu0 0.0
        %724 = vmatpush1.msra.mxu0 %v557
        %725 = vmatprep.subr.mxu0 0.0
        %726 = vmatpush1.msra.mxu0 %v556
        %727 = vmatprep.subr.mxu0 0.0
        %728 = vmatpush1.msra.mxu0 %v555
        %729 = vmatprep.subr.mxu0 0.0
        %730 = vmatpush1.msra.mxu0 %v554
        %731 = vmatprep.subr.mxu0 0.0
        %732 = vmatpush1.msra.mxu0 %v553
        %733 = vmatprep.subr.mxu0 0.0
        %734 = vmatpush1.msra.mxu0 %v552
        %735 = vmatprep.subr.mxu0 0.0
        %736 = vmatpush1.msra.mxu0 %v551
        %737 = vmatprep.subr.mxu0 0.0
        %738 = vmatpush1.msra.mxu0 %v550
        %739 = vmatprep.subr.mxu0 0.0
        %740 = vmatpush1.msra.mxu0 %v549
        %741 = vmatprep.subr.mxu0 0.0
        %742 = vmatpush1.msra.mxu0 %v548
        %743 = vmatprep.subr.mxu0 0.0
        %744 = vmatpush1.msra.mxu0 %v547
        %745 = vmatprep.subr.mxu0 0.0
        %746 = vmatpush1.msra.mxu0 %v546
        %747 = vmatprep.subr.mxu0 0.0
        %748 = vmatpush1.msra.mxu0 %v545
        %749 = vmatprep.subr.mxu0 0.0
        %750 = vmatpush1.msra.mxu0 %v544
        %751 = vmatprep.subr.mxu0 0.0
        %752 = vmatpush1.msra.mxu0 %v543
        %753 = vmatprep.subr.mxu0 0.0
        %754 = vmatpush1.msra.mxu0 %v542
        %755 = vmatprep.subr.mxu0 0.0
        %756 = vmatpush2.msra.mxu0 0.0
        %757 = vmatprep.subr.mxu0 0.0
        %758 = vmatpush2.msra.mxu0 0.0
        %759 = vmatprep.subr.mxu0 0.0
        %760 = vmatpush2.msra.mxu0 0.0
        %761 = vmatprep.subr.mxu0 0.0
        %762 = vmatpush2.msra.mxu0 0.0
        %763 = vmatprep.subr.mxu0 0.0
        %764 = vmatpush2.msra.mxu0 0.0
        %765 = vmatprep.subr.mxu0 0.0
        %766 = vmatpush2.msra.mxu0 0.0
        %767 = vmatprep.subr.mxu0 0.0
        %768 = vmatpush2.msra.mxu0 0.0
        %769 = vmatprep.subr.mxu0 0.0
        %770 = vmatpush2.msra.mxu0 0.0
        %771 = vmatprep.subr.mxu0 0.0
        %772 = vmatpush2.msra.mxu0 0.0
        %773 = vmatprep.subr.mxu0 0.0
        %774 = vmatpush2.msra.mxu0 0.0
        %775 = vmatprep.subr.mxu0 0.0
        %776 = vmatpush2.msra.mxu0 0.0
        %777 = vmatprep.subr.mxu0 0.0
        %778 = vmatpush2.msra.mxu0 0.0
        %779 = vmatprep.subr.mxu0 0.0
        %780 = vmatpush2.msra.mxu0 0.0
        %781 = vmatprep.subr.mxu0 0.0
        %782 = vmatpush2.msra.mxu0 0.0
        %783 = vmatprep.subr.mxu0 0.0
        %784 = vmatpush2.msra.mxu0 0.0
        %785 = vmatprep.subr.mxu0 0.0
        %786 = vmatpush2.msra.mxu0 0.0
        %787 = vmatprep.mubr.f32.mxu0 0.0
        %788 = vmatmul.mubr.f32.gmra.mxu0 %v569
        %v789 = vpop.f32.mrf.mxu0
        %v790 = vadd.f32 0.0, %v789
        %v791 = vpop.f32.mrf.mxu0
        %792 = vmatprep.mubr.f32.mxu0 0.0
        %793 = vmatmul.mubr.f32.gmra.mxu0 %v572
        %v794 = vpop.f32.mrf.mxu0
        %v795 = vadd.f32 0.0, %v794
        %v796 = vpop.f32.mrf.mxu0
        %797 = vdwg.mxu0
        %v798 = vadd.f32 %v715, %v790
        %v799 = vadd.f32 %v720, %v795
        %v801 = vlaneseq
        %v802 = vshrl.u32 %v801, 7
        %v803 = vsub.s32 0, %v802
        %v804 = vrot.slane %v558, %v803
        %v806 = vadd.f32 %v798, %v804
        %v807 = vadd.f32 %v799, %v804
        %v808 = vmax.f32 %v806, 0.0
        %v809 = vmax.f32 %v807, 0.0
        %810 = vst [vmem:[%s232] sm:$0xff] %v808
        %811 = vst [vmem:[%s232 + $0x8] sm:$0xff] %v809
        %s812 = sand.u32 %s138, 1
        %s813 = scalar_lea.sflag [#allocation4], %s812
        %s814 = sand.u32 %s138, 1
        %s815 = smul.addr %s814, 16
        %s816 = scalar_lea.vmem [#allocation5], %s815
        // Predicated region
        $region45: #{tpu_custom_call.1} parent=39 // pred_check
          %p817 = pneg %p148
        $region46: #{tpu_custom_call.1} parent=39 // pred_check_branch
          %819 = sbr.rel (%p817) target = $region48
        $region47: #{tpu_custom_call.1} parent=39 // pred_region
          %s821 = ssub.s32 256, 256
          %822 = vsyncadd %s813, %s821
          %s823 = smul.addr %s20, 128
          %s824 = scalar_lea.hbm %s5, %s823
          %s825 = sshll.u32 %s816, 4
          %s826 = int_to_ptr.vmem [resolvable:$true] %s825
          %831 = dma.vmem_to_hbm [thread:$0]  %s826, 256, %s824, %s813, 128, 256, 8
        $region48: #{tpu_custom_call.1} parent=39 // pred_fallthru
          _
      $region40: #{tpu_custom_call.1} parent=5 // pred_fallthru
        _
      %p832 = scmp.le.s32.totalorder 2, %s15
      // Predicated region
      $region49: #{tpu_custom_call.1} parent=5 // pred_check
        %p833 = pneg %p832
      $region50: #{tpu_custom_call.1} parent=5 // pred_check_branch
        %835 = sbr.rel (%p833) target = $region52
      $region51: #{tpu_custom_call.1} parent=5 // pred_region
        %s836 = ssub.s32 %s15, 2
        // Predicated region
        $region53: #{tpu_custom_call.1} parent=51 // pred_check
          %p837 = pneg %p154
        $region54: #{tpu_custom_call.1} parent=51 // pred_check_branch
          %839 = sbr.rel (%p837) target = $region56
        $region55: #{tpu_custom_call.1} parent=51 // pred_region
          %s840 = sand.u32 %s139, 1
          %s841 = scalar_lea.sflag [#allocation4], %s840
          %s842 = sand.u32 %s139, 1
          %s843 = smul.addr %s842, 16
          %s844 = scalar_lea.vmem [#allocation5], %s843
          %845 = dma.done %s841, 256
        $region56: #{tpu_custom_call.1} parent=51 // pred_fallthru
          _
      $region52: #{tpu_custom_call.1} parent=5 // pred_fallthru
        _
    $region6: #{tpu_custom_call.1} parent=1 // loop_footer
      %s19 = sadd.s32 1, %s15
    $region7: #{tpu_custom_call.1} parent=1 // loop_footer_branch
      %14 = sbr.rel target = $region3
    $region8: #{tpu_custom_call.1} parent=1 // loop_exit
      _
    %846 = vsyncpa [#allocation3], 1
    %s847 = scalar_lea.sflag [#allocation3], 1
    %848 = vsyncpa %s847, 1
    %849 = vsyncpa [#allocation4], 1
    %s850 = scalar_lea.sflag [#allocation4], 1
    %851 = vsyncpa %s850, 1

// kernel: tpu_custom_call.1
$region0: #{tpu_custom_call.1}
  #allocation0 [shape = 'u32[]', space=smem, size = 0x4, offset = 0x4, fixed_abs, tag = 'smem constant byte address 0x4 - core index']
  #allocation1 [shape = 'u32[144,128]{1,0:T(1,128)}', space=vmem, size = 0x12000, scoped, tag = 'internal scratch']
  %s0 = inlined_call_operand.vmem [shape: f32[2,16,8], index: 0, kind: input, shape index: {}]
  %s1 = inlined_call_operand.vmem [shape: f32[24,128], index: 1, kind: input, shape index: {}]
  %s2 = inlined_call_operand.vmem [shape: f32[1,128], index: 2, kind: input, shape index: {}]
  %s3 = inlined_call_operand.hbm [shape: f32[384,128], index: 3, kind: input, shape index: {}]
  %s4 = inlined_call_operand.vmem [shape: f32[1,128], index: 4, kind: input, shape index: {}]
  %s5 = inlined_call_operand.hbm [shape: f32[16,256], index: 5, kind: output, shape index: {}]
  %s6 = sld [smem:[#allocation0]]
  $region57: #{tpu_custom_call.1} parent=0
    _
  %s8 = ssub.s32 1, %s6
  %s9 = scalar_select 0, %s8, %s6
  $region1: #{tpu_custom_call.1} parent=0
    #allocation2 [shape = 'u8[196608]{0}', space=vmem, size = 0x30000, scoped, tag = 'input window, operand 3, single buffered']
    #allocation3 [shape = 's32[2]{0}', space=sflag, size = 0x8, scoped, tag = 'scoped memory for tpu_custom_call.1']
    #allocation4 [shape = 's32[2]{0}', space=sflag, size = 0x8, scoped, tag = 'scoped memory for tpu_custom_call.1']
    #allocation5 [shape = 'u8[16384]{0}', space=vmem, size = 0x4000, scoped, tag = 'output window, operand 0']
    %10 = vsyncpa [#allocation3], 0
    %11 = vsyncpa [#allocation4], 0
    %s12 = scalar_lea.sflag [#allocation4], 1
    %13 = vsyncpa %s12, 0
    loop: start=0, step=1, limit=4
    $region2: #{tpu_custom_call.1} parent=1 // loop_pre_header
      _
    $region3: #{tpu_custom_call.1} parent=1 // loop_header
      %s15 = sphi 0, %s19
      %p16 = scmp.ge.s32.totalorder %s15, 4
      %s25 = sphi 0, %s27
      %s28 = sphi 0, %s25
      %s29 = sphi 0, %s28
      %s45 = sphi 0, %s29
      %s49 = sphi 0, %s49
      %s51 = sphi 0, %s49
      %s52 = sphi 0, %s51
      %s66 = sphi 0, %s52
      %s70 = sphi 0, %s70
      %s72 = sphi 0, %s70
      %s73 = sphi 0, %s72
      %s87 = sphi 0, %s73
      %s91 = sphi 0, %s91
      %s93 = sphi 0, %s91
      %s94 = sphi 0, %s93
      %s108 = sphi 0, %s94
      %s112 = sphi 0, %s112
      %s114 = sphi 0, %s112
      %s115 = sphi 0, %s114
      %s129 = sphi 0, %s115
      %s135 = sphi 0, %s137
      %s138 = sphi 0, %s135
      %s139 = sphi 0, %s138
      %s155 = sphi 0, %s139
    $region4: #{tpu_custom_call.1} parent=1 // loop_header_branch
      %18 = sbr.rel (%p16) target = $region8
    $region5: #{tpu_custom_call.1} parent=1 // loop_body
      %s20 = ssub.s32 %s15, 1
      %s21 = ssub.s32 %s15, 2
      %s22 = sadd.s32 %s15, 1
      %s23 = ssub.s32 %s15, %s22
      %p24 = scmp.eq.s32.totalorder %s23, 0
      %s26 = sadd.s32 %s25, 1
      %s27 = scalar_select %p24, %s25, %s26
      %p30 = pneg %p24
      %p31 = scmp.eq.s32.totalorder %s15, 1
      %p32 = por %p30, %p31
      %p33 = scmp.ne.s32.totalorder %s25, %s28
      %p34 = scmp.eq.s32.totalorder %s15, 0
      %p35 = por %p33, %p34
      %p36 = scmp.ne.s32.totalorder %s25, %s28
      %p37 = scmp.eq.s32.totalorder %s20, 1
      %p38 = por %p36, %p37
      %p39 = scmp.ne.s32.totalorder %s28, %s29
      %p40 = scmp.eq.s32.totalorder %s20, 0
      %p41 = por %p39, %p40
      %p42 = scmp.ne.s32.totalorder %s28, %s29
      %p43 = scmp.eq.s32.totalorder %s21, 1
      %p44 = por %p42, %p43
      %p46 = scmp.ne.s32.totalorder %s29, %s45
      %p47 = scmp.eq.s32.totalorder %s21, 0
      %p48 = por %p46, %p47
      %s50 = sadd.s32 %s49, 1
      %p53 = scmp.eq.s32.totalorder %s15, 1
      %p54 = scmp.ne.s32.totalorder %s49, %s51
      %p55 = scmp.eq.s32.totalorder %s15, 0
      %p56 = por %p54, %p55
      %p57 = scmp.ne.s32.totalorder %s49, %s51
      %p58 = scmp.eq.s32.totalorder %s20, 1
      %p59 = por %p57, %p58
      %p60 = scmp.ne.s32.totalorder %s51, %s52
      %p61 = scmp.eq.s32.totalorder %s20, 0
      %p62 = por %p60, %p61
      %p63 = scmp.ne.s32.totalorder %s51, %s52
      %p64 = scmp.eq.s32.totalorder %s21, 1
      %p65 = por %p63, %p64
      %p67 = scmp.ne.s32.totalorder %s52, %s66
      %p68 = scmp.eq.s32.totalorder %s21, 0
      %p69 = por %p67, %p68
      %s71 = sadd.s32 %s70, 1
      %p74 = scmp.eq.s32.totalorder %s15, 1
      %p75 = scmp.ne.s32.totalorder %s70, %s72
      %p76 = scmp.eq.s32.totalorder %s15, 0
      %p77 = por %p75, %p76
      %p78 = scmp.ne.s32.totalorder %s70, %s72
      %p79 = scmp.eq.s32.totalorder %s20, 1
      %p80 = por %p78, %p79
      %p81 = scmp.ne.s32.totalorder %s72, %s73
      %p82 = scmp.eq.s32.totalorder %s20, 0
      %p83 = por %p81, %p82
      %p84 = scmp.ne.s32.totalorder %s72, %s73
      %p85 = scmp.eq.s32.totalorder %s21, 1
      %p86 = por %p84, %p85
      %p88 = scmp.ne.s32.totalorder %s73, %s87
      %p89 = scmp.eq.s32.totalorder %s21, 0
      %p90 = por %p88, %p89
      %s92 = sadd.s32 %s91, 1
      %p95 = scmp.eq.s32.totalorder %s15, 1
      %p96 = scmp.ne.s32.totalorder %s91, %s93
      %p97 = scmp.eq.s32.totalorder %s15, 0
      %p98 = por %p96, %p97
      %p99 = scmp.ne.s32.totalorder %s91, %s93
      %p100 = scmp.eq.s32.totalorder %s20, 1
      %p101 = por %p99, %p100
      %p102 = scmp.ne.s32.totalorder %s93, %s94
      %p103 = scmp.eq.s32.totalorder %s20, 0
      %p104 = por %p102, %p103
      %p105 = scmp.ne.s32.totalorder %s93, %s94
      %p106 = scmp.eq.s32.totalorder %s21, 1
      %p107 = por %p105, %p106
      %p109 = scmp.ne.s32.totalorder %s94, %s108
      %p110 = scmp.eq.s32.totalorder %s21, 0
      %p111 = por %p109, %p110
      %s113 = sadd.s32 %s112, 1
      %p116 = scmp.eq.s32.totalorder %s15, 1
      %p117 = scmp.ne.s32.totalorder %s112, %s114
      %p118 = scmp.eq.s32.totalorder %s15, 0
      %p119 = por %p117, %p118
      %p120 = scmp.ne.s32.totalorder %s112, %s114
      %p121 = scmp.eq.s32.totalorder %s20, 1
      %p122 = por %p120, %p121
      %p123 = scmp.ne.s32.totalorder %s114, %s115
      %p124 = scmp.eq.s32.totalorder %s20, 0
      %p125 = por %p123, %p124
      %p126 = scmp.ne.s32.totalorder %s114, %s115
      %p127 = scmp.eq.s32.totalorder %s21, 1
      %p128 = por %p126, %p127
      %p130 = scmp.ne.s32.totalorder %s115, %s129
      %p131 = scmp.eq.s32.totalorder %s21, 0
      %p132 = por %p130, %p131
      %s133 = ssub.s32 %s15, %s22
      %p134 = scmp.eq.s32.totalorder %s133, 0
      %s136 = sadd.s32 %s135, 1
      %s137 = scalar_select %p134, %s135, %s136
      %p140 = pneg %p134
      %p141 = scmp.eq.s32.totalorder %s15, 1
      %p142 = por %p140, %p141
      %p143 = scmp.ne.s32.totalorder %s135, %s138
      %p144 = scmp.eq.s32.totalorder %s15, 0
      %p145 = por %p143, %p144
      %p146 = scmp.ne.s32.totalorder %s135, %s138
      %p147 = scmp.eq.s32.totalorder %s20, 1
      %p148 = por %p146, %p147
      %p149 = scmp.ne.s32.totalorder %s138, %s139
      %p150 = scmp.eq.s32.totalorder %s20, 0
      %p151 = por %p149, %p150
      %p152 = scmp.ne.s32.totalorder %s138, %s139
      %p153 = scmp.eq.s32.totalorder %s21, 1
      %p154 = por %p152, %p153
      %p156 = scmp.ne.s32.totalorder %s139, %s155
      %p157 = scmp.eq.s32.totalorder %s21, 0
      %p158 = por %p156, %p157
      %p159 = scmp.le.s32.totalorder 1, %s15
      %p160 = scmp.lt.s32.totalorder %s15, 3
      %p161 = pnand %p159, %p160
      %p162 = pneg %p161
      // Predicated region
      $region9: #{tpu_custom_call.1} parent=5 // pred_check
        _
      $region10: #{tpu_custom_call.1} parent=5 // pred_check_branch
        %164 = sbr.rel (%p161) target = $region12
      $region11: #{tpu_custom_call.1} parent=5 // pred_region
        %s165 = ssub.s32 %s15, 1
        // Predicated region
        $region13: #{tpu_custom_call.1} parent=11 // pred_check
          %p166 = pneg %p62
        $region14: #{tpu_custom_call.1} parent=11 // pred_check_branch
          %168 = sbr.rel (%p166) target = $region16
        $region15: #{tpu_custom_call.1} parent=11 // pred_region
          _
        $region16: #{tpu_custom_call.1} parent=11 // pred_fallthru
          _
        // Predicated region
        $region17: #{tpu_custom_call.1} parent=11 // pred_check
          %p169 = pneg %p83
        $region18: #{tpu_custom_call.1} parent=11 // pred_check_branch
          %171 = sbr.rel (%p169) target = $region20
        $region19: #{tpu_custom_call.1} parent=11 // pred_region
          _
        $region20: #{tpu_custom_call.1} parent=11 // pred_fallthru
          _
        // Predicated region
        $region21: #{tpu_custom_call.1} parent=11 // pred_check
          %p172 = pneg %p104
        $region22: #{tpu_custom_call.1} parent=11 // pred_check_branch
          %174 = sbr.rel (%p172) target = $region24
        $region23: #{tpu_custom_call.1} parent=11 // pred_region
          %s176 = ssub.s32 6144, 6144
          %177 = vsyncadd [#allocation3], %s176
          %s178 = sshll.u32 [#allocation2], 4
          %s179 = int_to_ptr.vmem [resolvable:$true] %s178
          %184 = dma.hbm_to_vmem [thread:$0]  %s3, 6144, %s179, [#allocation3], 128, 128, 8
        $region24: #{tpu_custom_call.1} parent=11 // pred_fallthru
          _
        // Predicated region
        $region25: #{tpu_custom_call.1} parent=11 // pred_check
          %p185 = pneg %p125
        $region26: #{tpu_custom_call.1} parent=11 // pred_check_branch
          %187 = sbr.rel (%p185) target = $region28
        $region27: #{tpu_custom_call.1} parent=11 // pred_region
          _
        $region28: #{tpu_custom_call.1} parent=11 // pred_fallthru
          _
      $region12: #{tpu_custom_call.1} parent=5 // pred_fallthru
        _
      %p188 = scmp.lt.s32.totalorder %s15, 2
      // Predicated region
      $region29: #{tpu_custom_call.1} parent=5 // pred_check
        %p189 = pneg %p188
      $region30: #{tpu_custom_call.1} parent=5 // pred_check_branch
        %191 = sbr.rel (%p189) target = $region32
      $region31: #{tpu_custom_call.1} parent=5 // pred_region
        // Predicated region
        $region33: #{tpu_custom_call.1} parent=31 // pred_check
          %p192 = pneg %p35
        $region34: #{tpu_custom_call.1} parent=31 // pred_check_branch
          %194 = sbr.rel (%p192) target = $region36
        $region35: #{tpu_custom_call.1} parent=31 // pred_region
          %p195 = scmp.lt.s32.totalorder %s15, 1
          %s196 = scalar_select %p195, %s15, 1
          %s197 = smul.addr %s196, 2
          %s198 = smul.addr %s197, 8
          %s199 = scalar_lea.vmem %s0, %s198
        $region36: #{tpu_custom_call.1} parent=31 // pred_fallthru
          _
      $region32: #{tpu_custom_call.1} parent=5 // pred_fallthru
        _
      %p200 = scmp.le.s32.totalorder 1, %s15
      %p201 = scmp.lt.s32.totalorder %s15, 3
      %p202 = pnand %p200, %p201
      %p203 = pneg %p202
      // Predicated region
      $region37: #{tpu_custom_call.1} parent=5 // pred_check
        _
      $region38: #{tpu_custom_call.1} parent=5 // pred_check_branch
        %205 = sbr.rel (%p202) target = $region40
      $region39: #{tpu_custom_call.1} parent=5 // pred_region
        %s206 = ssub.s32 %s15, 1
        // Predicated region
        $region41: #{tpu_custom_call.1} parent=39 // pred_check
          %p207 = pneg %p104
        $region42: #{tpu_custom_call.1} parent=39 // pred_check_branch
          %209 = sbr.rel (%p207) target = $region44
        $region43: #{tpu_custom_call.1} parent=39 // pred_region
          %210 = dma.done [#allocation3], 6144
        $region44: #{tpu_custom_call.1} parent=39 // pred_fallthru
          _
        %p211 = scmp.lt.s32.totalorder %s20, 1
        %s212 = scalar_select %p211, %s20, 1
        %s213 = smul.addr %s212, 2
        %s214 = smul.addr %s213, 8
        %s215 = scalar_lea.vmem %s0, %s214
        %p216 = pneg %p41
        %p217 = pneg %p38
        %p218 = pneg %p62
        %p219 = pneg %p59
        %p220 = pneg %p83
        %p221 = pneg %p80
        %p222 = pneg %p104
        %p223 = pneg %p101
        %p224 = pneg %p125
        %p225 = pneg %p122
        %p226 = pneg %p151
        %p227 = pneg %p148
        %s228 = sand.u32 %s138, 1
        %s229 = scalar_lea.sflag [#allocation4], %s228
        %s230 = sand.u32 %s138, 1
        %s231 = smul.addr %s230, 16
        %s232 = scalar_lea.vmem [#allocation5], %s231
        %p233 = scmp.lt.s32.totalorder %s20, 1
        %s234 = scalar_select %p233, %s20, 1
        %s235 = smul.addr %s234, 2
        %s236 = smul.addr %s235, 8
        %s237 = scalar_lea.vmem %s0, %s236
        %v238 = vld [vmem:[%s237] sm:$0xff]
        %v239 = vld [vmem:[%s237 + $0x8] sm:$0xff]
        %v240 = vld [vmem:[%s1] sm:$0xff]
        %v241 = vld [vmem:[%s1 + $0x8] sm:$0xff]
        %v242 = vld [vmem:[%s1 + $0x10] sm:$0xff]
        %v243 = vld [vmem:[%s2] sm:$0x1]
        %vm246 = vcmask 1040384
        %v247 = vrot.slane %v238, 7
        %v248 = vrot.slane %v239, 7
        %v249 = vsel %vm246, %v247, %v248
        %v251 = vsel %vm246, 0.0, %v247
        %vm252 = vcmask 1046528
        %v253 = vrot.slane %v238, 1
        %v254 = vrot.slane %v239, 1
        %v255 = vsel %vm252, %v253, %v254
        %v257 = vsel %vm252, %v254, 0.0
        %vm258 = vcmask 64512
        %v259 = vsel %vm258, %v238, 0
        %v261 = vsel %vm258, %v239, 0
        %263 = vmatprep.subr.mxu0 0.0
        %264 = vmatpush1.msra.mxu0 0.0
        %265 = vmatprep.subr.mxu0 0.0
        %266 = vmatpush1.msra.mxu0 0.0
        %267 = vmatprep.subr.mxu0 0.0
        %268 = vmatpush1.msra.mxu0 0.0
        %269 = vmatprep.subr.mxu0 0.0
        %270 = vmatpush1.msra.mxu0 0.0
        %271 = vmatprep.subr.mxu0 0.0
        %272 = vmatpush1.msra.mxu0 0.0
        %273 = vmatprep.subr.mxu0 0.0
        %274 = vmatpush1.msra.mxu0 0.0
        %275 = vmatprep.subr.mxu0 0.0
        %276 = vmatpush1.msra.mxu0 0.0
        %277 = vmatprep.subr.mxu0 0.0
        %278 = vmatpush1.msra.mxu0 0.0
        %279 = vmatprep.subr.mxu0 0.0
        %280 = vmatpush1.msra.mxu0 0.0
        %281 = vmatprep.subr.mxu0 0.0
        %282 = vmatpush1.msra.mxu0 0.0
        %283 = vmatprep.subr.mxu0 0.0
        %284 = vmatpush1.msra.mxu0 0.0
        %285 = vmatprep.subr.mxu0 0.0
        %286 = vmatpush1.msra.mxu0 0.0
        %287 = vmatprep.subr.mxu0 0.0
        %288 = vmatpush1.msra.mxu0 0.0
        %289 = vmatprep.subr.mxu0 0.0
        %290 = vmatpush1.msra.mxu0 0.0
        %291 = vmatprep.subr.mxu0 0.0
        %292 = vmatpush1.msra.mxu0 0.0
        %293 = vmatprep.subr.mxu0 0.0
        %294 = vmatpush1.msra.mxu0 %v241
        %295 = vmatprep.subr.mxu0 0.0
        %296 = vmatpush2.msra.mxu0 0.0
        %297 = vmatprep.subr.mxu0 0.0
        %298 = vmatpush2.msra.mxu0 0.0
        %299 = vmatprep.subr.mxu0 0.0
        %300 = vmatpush2.msra.mxu0 0.0
        %301 = vmatprep.subr.mxu0 0.0
        %302 = vmatpush2.msra.mxu0 0.0
        %303 = vmatprep.subr.mxu0 0.0
        %304 = vmatpush2.msra.mxu0 0.0
        %305 = vmatprep.subr.mxu0 0.0
        %306 = vmatpush2.msra.mxu0 0.0
        %307 = vmatprep.subr.mxu0 0.0
        %308 = vmatpush2.msra.mxu0 0.0
        %309 = vmatprep.subr.mxu0 0.0
        %310 = vmatpush2.msra.mxu0 0.0
        %311 = vmatprep.subr.mxu0 0.0
        %312 = vmatpush2.msra.mxu0 0.0
        %313 = vmatprep.subr.mxu0 0.0
        %314 = vmatpush2.msra.mxu0 0.0
        %315 = vmatprep.subr.mxu0 0.0
        %316 = vmatpush2.msra.mxu0 0.0
        %317 = vmatprep.subr.mxu0 0.0
        %318 = vmatpush2.msra.mxu0 0.0
        %319 = vmatprep.subr.mxu0 0.0
        %320 = vmatpush2.msra.mxu0 0.0
        %321 = vmatprep.subr.mxu0 0.0
        %322 = vmatpush2.msra.mxu0 0.0
        %323 = vmatprep.subr.mxu0 0.0
        %324 = vmatpush2.msra.mxu0 0.0
        %325 = vmatprep.subr.mxu0 0.0
        %326 = vmatpush2.msra.mxu0 0.0
        %327 = vmatprep.mubr.f32.mxu0 0.0
        %328 = vmatmul.mubr.f32.gmra.mxu0 %v259
        %v329 = vpop.f32.mrf.mxu0
        %v330 = vadd.f32 0.0, %v329
        %v331 = vpop.f32.mrf.mxu0
        %332 = vmatprep.mubr.f32.mxu0 0.0
        %333 = vmatmul.mubr.f32.gmra.mxu0 %v261
        %v334 = vpop.f32.mrf.mxu0
        %v335 = vadd.f32 0.0, %v334
        %v336 = vpop.f32.mrf.mxu0
        %337 = vdwg.mxu0
        %v339 = vsel %vm258, %v251, 0
        %v341 = vsel %vm258, %v249, 0
        %343 = vmatprep.subr.mxu0 0.0
        %344 = vmatpush1.msra.mxu0 0.0
        %345 = vmatprep.subr.mxu0 0.0
        %346 = vmatpush1.msra.mxu0 0.0
        %347 = vmatprep.subr.mxu0 0.0
        %348 = vmatpush1.msra.mxu0 0.0
        %349 = vmatprep.subr.mxu0 0.0
        %350 = vmatpush1.msra.mxu0 0.0
        %351 = vmatprep.subr.mxu0 0.0
        %352 = vmatpush1.msra.mxu0 0.0
        %353 = vmatprep.subr.mxu0 0.0
        %354 = vmatpush1.msra.mxu0 0.0
        %355 = vmatprep.subr.mxu0 0.0
        %356 = vmatpush1.msra.mxu0 0.0
        %357 = vmatprep.subr.mxu0 0.0
        %358 = vmatpush1.msra.mxu0 0.0
        %359 = vmatprep.subr.mxu0 0.0
        %360 = vmatpush1.msra.mxu0 0.0
        %361 = vmatprep.subr.mxu0 0.0
        %362 = vmatpush1.msra.mxu0 0.0
        %363 = vmatprep.subr.mxu0 0.0
        %364 = vmatpush1.msra.mxu0 0.0
        %365 = vmatprep.subr.mxu0 0.0
        %366 = vmatpush1.msra.mxu0 0.0
        %367 = vmatprep.subr.mxu0 0.0
        %368 = vmatpush1.msra.mxu0 0.0
        %369 = vmatprep.subr.mxu0 0.0
        %370 = vmatpush1.msra.mxu0 0.0
        %371 = vmatprep.subr.mxu0 0.0
        %372 = vmatpush1.msra.mxu0 0.0
        %373 = vmatprep.subr.mxu0 0.0
        %374 = vmatpush1.msra.mxu0 %v240
        %375 = vmatprep.subr.mxu0 0.0
        %376 = vmatpush2.msra.mxu0 0.0
        %377 = vmatprep.subr.mxu0 0.0
        %378 = vmatpush2.msra.mxu0 0.0
        %379 = vmatprep.subr.mxu0 0.0
        %380 = vmatpush2.msra.mxu0 0.0
        %381 = vmatprep.subr.mxu0 0.0
        %382 = vmatpush2.msra.mxu0 0.0
        %383 = vmatprep.subr.mxu0 0.0
        %384 = vmatpush2.msra.mxu0 0.0
        %385 = vmatprep.subr.mxu0 0.0
        %386 = vmatpush2.msra.mxu0 0.0
        %387 = vmatprep.subr.mxu0 0.0
        %388 = vmatpush2.msra.mxu0 0.0
        %389 = vmatprep.subr.mxu0 0.0
        %390 = vmatpush2.msra.mxu0 0.0
        %391 = vmatprep.subr.mxu0 0.0
        %392 = vmatpush2.msra.mxu0 0.0
        %393 = vmatprep.subr.mxu0 0.0
        %394 = vmatpush2.msra.mxu0 0.0
        %395 = vmatprep.subr.mxu0 0.0
        %396 = vmatpush2.msra.mxu0 0.0
        %397 = vmatprep.subr.mxu0 0.0
        %398 = vmatpush2.msra.mxu0 0.0
        %399 = vmatprep.subr.mxu0 0.0
        %400 = vmatpush2.msra.mxu0 0.0
        %401 = vmatprep.subr.mxu0 0.0
        %402 = vmatpush2.msra.mxu0 0.0
        %403 = vmatprep.subr.mxu0 0.0
        %404 = vmatpush2.msra.mxu0 0.0
        %405 = vmatprep.subr.mxu0 0.0
        %406 = vmatpush2.msra.mxu0 0.0
        %407 = vmatprep.mubr.f32.mxu0 0.0
        %408 = vmatmul.mubr.f32.gmra.mxu0 %v339
        %v409 = vpop.f32.mrf.mxu0
        %v410 = vadd.f32 %v330, %v409
        %v411 = vpop.f32.mrf.mxu0
        %412 = vmatprep.mubr.f32.mxu0 0.0
        %413 = vmatmul.mubr.f32.gmra.mxu0 %v341
        %v414 = vpop.f32.mrf.mxu0
        %v415 = vadd.f32 %v335, %v414
        %v416 = vpop.f32.mrf.mxu0
        %417 = vdwg.mxu0
        %v418 = vsel %vm258, %v255, 0
        %v421 = vsel %vm258, %v257, 0
        %423 = vmatprep.subr.mxu0 0.0
        %424 = vmatpush1.msra.mxu0 0.0
        %425 = vmatprep.subr.mxu0 0.0
        %426 = vmatpush1.msra.mxu0 0.0
        %427 = vmatprep.subr.mxu0 0.0
        %428 = vmatpush1.msra.mxu0 0.0
        %429 = vmatprep.subr.mxu0 0.0
        %430 = vmatpush1.msra.mxu0 0.0
        %431 = vmatprep.subr.mxu0 0.0
        %432 = vmatpush1.msra.mxu0 0.0
        %433 = vmatprep.subr.mxu0 0.0
        %434 = vmatpush1.msra.mxu0 0.0
        %435 = vmatprep.subr.mxu0 0.0
        %436 = vmatpush1.msra.mxu0 0.0
        %437 = vmatprep.subr.mxu0 0.0
        %438 = vmatpush1.msra.mxu0 0.0
        %439 = vmatprep.subr.mxu0 0.0
        %440 = vmatpush1.msra.mxu0 0.0
        %441 = vmatprep.subr.mxu0 0.0
        %442 = vmatpush1.msra.mxu0 0.0
        %443 = vmatprep.subr.mxu0 0.0
        %444 = vmatpush1.msra.mxu0 0.0
        %445 = vmatprep.subr.mxu0 0.0
        %446 = vmatpush1.msra.mxu0 0.0
        %447 = vmatprep.subr.mxu0 0.0
        %448 = vmatpush1.msra.mxu0 0.0
        %449 = vmatprep.subr.mxu0 0.0
        %450 = vmatpush1.msra.mxu0 0.0
        %451 = vmatprep.subr.mxu0 0.0
        %452 = vmatpush1.msra.mxu0 0.0
        %453 = vmatprep.subr.mxu0 0.0
        %454 = vmatpush1.msra.mxu0 %v242
        %455 = vmatprep.subr.mxu0 0.0
        %456 = vmatpush2.msra.mxu0 0.0
        %457 = vmatprep.subr.mxu0 0.0
        %458 = vmatpush2.msra.mxu0 0.0
        %459 = vmatprep.subr.mxu0 0.0
        %460 = vmatpush2.msra.mxu0 0.0
        %461 = vmatprep.subr.mxu0 0.0
        %462 = vmatpush2.msra.mxu0 0.0
        %463 = vmatprep.subr.mxu0 0.0
        %464 = vmatpush2.msra.mxu0 0.0
        %465 = vmatprep.subr.mxu0 0.0
        %466 = vmatpush2.msra.mxu0 0.0
        %467 = vmatprep.subr.mxu0 0.0
        %468 = vmatpush2.msra.mxu0 0.0
        %469 = vmatprep.subr.mxu0 0.0
        %470 = vmatpush2.msra.mxu0 0.0
        %471 = vmatprep.subr.mxu0 0.0
        %472 = vmatpush2.msra.mxu0 0.0
        %473 = vmatprep.subr.mxu0 0.0
        %474 = vmatpush2.msra.mxu0 0.0
        %475 = vmatprep.subr.mxu0 0.0
        %476 = vmatpush2.msra.mxu0 0.0
        %477 = vmatprep.subr.mxu0 0.0
        %478 = vmatpush2.msra.mxu0 0.0
        %479 = vmatprep.subr.mxu0 0.0
        %480 = vmatpush2.msra.mxu0 0.0
        %481 = vmatprep.subr.mxu0 0.0
        %482 = vmatpush2.msra.mxu0 0.0
        %483 = vmatprep.subr.mxu0 0.0
        %484 = vmatpush2.msra.mxu0 0.0
        %485 = vmatprep.subr.mxu0 0.0
        %486 = vmatpush2.msra.mxu0 0.0
        %487 = vmatprep.mubr.f32.mxu0 0.0
        %488 = vmatmul.mubr.f32.gmra.mxu0 %v418
        %v489 = vpop.f32.mrf.mxu0
        %v490 = vadd.f32 0.0, %v489
        %v491 = vpop.f32.mrf.mxu0
        %492 = vmatprep.mubr.f32.mxu0 0.0
        %493 = vmatmul.mubr.f32.gmra.mxu0 %v421
        %v494 = vpop.f32.mrf.mxu0
        %v495 = vadd.f32 0.0, %v494
        %v496 = vpop.f32.mrf.mxu0
        %497 = vdwg.mxu0
        %v498 = vadd.f32 %v410, %v490
        %v499 = vadd.f32 %v415, %v495
        %v501 = vlaneseq
        %v502 = vshrl.u32 %v501, 7
        %v503 = vsub.s32 0, %v502
        %v504 = vrot.slane %v243, %v503
        %v506 = vadd.f32 %v498, %v504
        %v507 = vadd.f32 %v499, %v504
        %v508 = vmax.f32 %v506, 0.0
        %v509 = vmax.f32 %v507, 0.0
        %v510 = vld [vmem:[#allocation2] sm:$0xff]
        %v511 = vld [vmem:[#allocation2 + $0x8] sm:$0xff]
        %v512 = vld [vmem:[#allocation2 + $0x10] sm:$0xff]
        %v513 = vld [vmem:[#allocation2 + $0x18] sm:$0xff]
        %v514 = vld [vmem:[#allocation2 + $0x20] sm:$0xff]
        %v515 = vld [vmem:[#allocation2 + $0x28] sm:$0xff]
        %v516 = vld [vmem:[#allocation2 + $0x30] sm:$0xff]
        %v517 = vld [vmem:[#allocation2 + $0x38] sm:$0xff]
        %v518 = vld [vmem:[#allocation2 + $0x40] sm:$0xff]
        %v519 = vld [vmem:[#allocation2 + $0x48] sm:$0xff]
        %v520 = vld [vmem:[#allocation2 + $0x50] sm:$0xff]
        %v521 = vld [vmem:[#allocation2 + $0x58] sm:$0xff]
        %v522 = vld [vmem:[#allocation2 + $0x60] sm:$0xff]
        %v523 = vld [vmem:[#allocation2 + $0x68] sm:$0xff]
        %v524 = vld [vmem:[#allocation2 + $0x70] sm:$0xff]
        %v525 = vld [vmem:[#allocation2 + $0x78] sm:$0xff]
        %v526 = vld [vmem:[#allocation2 + $0x80] sm:$0xff]
        %v527 = vld [vmem:[#allocation2 + $0x88] sm:$0xff]
        %v528 = vld [vmem:[#allocation2 + $0x90] sm:$0xff]
        %v529 = vld [vmem:[#allocation2 + $0x98] sm:$0xff]
        %v530 = vld [vmem:[#allocation2 + $0xa0] sm:$0xff]
        %v531 = vld [vmem:[#allocation2 + $0xa8] sm:$0xff]
        %v532 = vld [vmem:[#allocation2 + $0xb0] sm:$0xff]
        %v533 = vld [vmem:[#allocation2 + $0xb8] sm:$0xff]
        %v534 = vld [vmem:[#allocation2 + $0xc0] sm:$0xff]
        %v535 = vld [vmem:[#allocation2 + $0xc8] sm:$0xff]
        %v536 = vld [vmem:[#allocation2 + $0xd0] sm:$0xff]
        %v537 = vld [vmem:[#allocation2 + $0xd8] sm:$0xff]
        %v538 = vld [vmem:[#allocation2 + $0xe0] sm:$0xff]
        %v539 = vld [vmem:[#allocation2 + $0xe8] sm:$0xff]
        %v540 = vld [vmem:[#allocation2 + $0xf0] sm:$0xff]
        %v541 = vld [vmem:[#allocation2 + $0xf8] sm:$0xff]
        %v542 = vld [vmem:[#allocation2 + $0x100] sm:$0xff]
        %v543 = vld [vmem:[#allocation2 + $0x108] sm:$0xff]
        %v544 = vld [vmem:[#allocation2 + $0x110] sm:$0xff]
        %v545 = vld [vmem:[#allocation2 + $0x118] sm:$0xff]
        %v546 = vld [vmem:[#allocation2 + $0x120] sm:$0xff]
        %v547 = vld [vmem:[#allocation2 + $0x128] sm:$0xff]
        %v548 = vld [vmem:[#allocation2 + $0x130] sm:$0xff]
        %v549 = vld [vmem:[#allocation2 + $0x138] sm:$0xff]
        %v550 = vld [vmem:[#allocation2 + $0x140] sm:$0xff]
        %v551 = vld [vmem:[#allocation2 + $0x148] sm:$0xff]
        %v552 = vld [vmem:[#allocation2 + $0x150] sm:$0xff]
        %v553 = vld [vmem:[#allocation2 + $0x158] sm:$0xff]
        %v554 = vld [vmem:[#allocation2 + $0x160] sm:$0xff]
        %v555 = vld [vmem:[#allocation2 + $0x168] sm:$0xff]
        %v556 = vld [vmem:[#allocation2 + $0x170] sm:$0xff]
        %v557 = vld [vmem:[#allocation2 + $0x178] sm:$0xff]
        %v558 = vld [vmem:[%s4] sm:$0x1]
        %v561 = vrot.slane %v508, 7
        %v562 = vrot.slane %v509, 7
        %v563 = vsel %vm246, %v561, %v562
        %v566 = vsel %vm246, 0.0, %v561
        %v567 = vrot.slane %v508, 1
        %v568 = vrot.slane %v509, 1
        %v569 = vsel %vm252, %v567, %v568
        %v572 = vsel %vm252, %v568, 0.0
        %573 = vmatprep.subr.mxu0 0.0
        %574 = vmatpush1.msra.mxu0 %v541
        %575 = vmatprep.subr.mxu0 0.0
        %576 = vmatpush1.msra.mxu0 %v540
        %577 = vmatprep.subr.mxu0 0.0
        %578 = vmatpush1.msra.mxu0 %v539
        %579 = vmatprep.subr.mxu0 0.0
        %580 = vmatpush1.msra.mxu0 %v538
        %581 = vmatprep.subr.mxu0 0.0
        %582 = vmatpush1.msra.mxu0 %v537
        %583 = vmatprep.subr.mxu0 0.0
        %584 = vmatpush1.msra.mxu0 %v536
        %585 = vmatprep.subr.mxu0 0.0
        %586 = vmatpush1.msra.mxu0 %v535
        %587 = vmatprep.subr.mxu0 0.0
        %588 = vmatpush1.msra.mxu0 %v534
        %589 = vmatprep.subr.mxu0 0.0
        %590 = vmatpush1.msra.mxu0 %v533
        %591 = vmatprep.subr.mxu0 0.0
        %592 = vmatpush1.msra.mxu0 %v532
        %593 = vmatprep.subr.mxu0 0.0
        %594 = vmatpush1.msra.mxu0 %v531
        %595 = vmatprep.subr.mxu0 0.0
        %596 = vmatpush1.msra.mxu0 %v530
        %597 = vmatprep.subr.mxu0 0.0
        %598 = vmatpush1.msra.mxu0 %v529
        %599 = vmatprep.subr.mxu0 0.0
        %600 = vmatpush1.msra.mxu0 %v528
        %601 = vmatprep.subr.mxu0 0.0
        %602 = vmatpush1.msra.mxu0 %v527
        %603 = vmatprep.subr.mxu0 0.0
        %604 = vmatpush1.msra.mxu0 %v526
        %605 = vmatprep.subr.mxu0 0.0
        %606 = vmatpush2.msra.mxu0 0.0
        %607 = vmatprep.subr.mxu0 0.0
        %608 = vmatpush2.msra.mxu0 0.0
        %609 = vmatprep.subr.mxu0 0.0
        %610 = vmatpush2.msra.mxu0 0.0
        %611 = vmatprep.subr.mxu0 0.0
        %612 = vmatpush2.msra.mxu0 0.0
        %613 = vmatprep.subr.mxu0 0.0
        %614 = vmatpush2.msra.mxu0 0.0
        %615 = vmatprep.subr.mxu0 0.0
        %616 = vmatpush2.msra.mxu0 0.0
        %617 = vmatprep.subr.mxu0 0.0
        %618 = vmatpush2.msra.mxu0 0.0
        %619 = vmatprep.subr.mxu0 0.0
        %620 = vmatpush2.msra.mxu0 0.0
        %621 = vmatprep.subr.mxu0 0.0
        %622 = vmatpush2.msra.mxu0 0.0
        %623 = vmatprep.subr.mxu0 0.0
        %624 = vmatpush2.msra.mxu0 0.0
        %625 = vmatprep.subr.mxu0 0.0
        %626 = vmatpush2.msra.mxu0 0.0
        %627 = vmatprep.subr.mxu0 0.0
        %628 = vmatpush2.msra.mxu0 0.0
        %629 = vmatprep.subr.mxu0 0.0
        %630 = vmatpush2.msra.mxu0 0.0
        %631 = vmatprep.subr.mxu0 0.0
        %632 = vmatpush2.msra.mxu0 0.0
        %633 = vmatprep.subr.mxu0 0.0
        %634 = vmatpush2.msra.mxu0 0.0
        %635 = vmatprep.subr.mxu0 0.0
        %636 = vmatpush2.msra.mxu0 0.0
        %637 = vmatprep.mubr.f32.mxu0 0.0
        %638 = vmatmul.mubr.f32.gmra.mxu0 %v508
        %v639 = vpop.f32.mrf.mxu0
        %v640 = vadd.f32 0.0, %v639
        %v641 = vpop.f32.mrf.mxu0
        %642 = vmatprep.mubr.f32.mxu0 0.0
        %643 = vmatmul.mubr.f32.gmra.mxu0 %v509
        %v644 = vpop.f32.mrf.mxu0
        %v645 = vadd.f32 0.0, %v644
        %v646 = vpop.f32.mrf.mxu0
        %647 = vdwg.mxu0
        %648 = vmatprep.subr.mxu0 0.0
        %649 = vmatpush1.msra.mxu0 %v525
        %650 = vmatprep.subr.mxu0 0.0
        %651 = vmatpush1.msra.mxu0 %v524
        %652 = vmatprep.subr.mxu0 0.0
        %653 = vmatpush1.msra.mxu0 %v523
        %654 = vmatprep.subr.mxu0 0.0
        %655 = vmatpush1.msra.mxu0 %v522
        %656 = vmatprep.subr.mxu0 0.0
        %657 = vmatpush1.msra.mxu0 %v521
        %658 = vmatprep.subr.mxu0 0.0
        %659 = vmatpush1.msra.mxu0 %v520
        %660 = vmatprep.subr.mxu0 0.0
        %661 = vmatpush1.msra.mxu0 %v519
        %662 = vmatprep.subr.mxu0 0.0
        %663 = vmatpush1.msra.mxu0 %v518
        %664 = vmatprep.subr.mxu0 0.0
        %665 = vmatpush1.msra.mxu0 %v517
        %666 = vmatprep.subr.mxu0 0.0
        %667 = vmatpush1.msra.mxu0 %v516
        %668 = vmatprep.subr.mxu0 0.0
        %669 = vmatpush1.msra.mxu0 %v515
        %670 = vmatprep.subr.mxu0 0.0
        %671 = vmatpush1.msra.mxu0 %v514
        %672 = vmatprep.subr.mxu0 0.0
        %673 = vmatpush1.msra.mxu0 %v513
        %674 = vmatprep.subr.mxu0 0.0
        %675 = vmatpush1.msra.mxu0 %v512
        %676 = vmatprep.subr.mxu0 0.0
        %677 = vmatpush1.msra.mxu0 %v511
        %678 = vmatprep.subr.mxu0 0.0
        %679 = vmatpush1.msra.mxu0 %v510
        %680 = vmatprep.subr.mxu0 0.0
        %681 = vmatpush2.msra.mxu0 0.0
        %682 = vmatprep.subr.mxu0 0.0
        %683 = vmatpush2.msra.mxu0 0.0
        %684 = vmatprep.subr.mxu0 0.0
        %685 = vmatpush2.msra.mxu0 0.0
        %686 = vmatprep.subr.mxu0 0.0
        %687 = vmatpush2.msra.mxu0 0.0
        %688 = vmatprep.subr.mxu0 0.0
        %689 = vmatpush2.msra.mxu0 0.0
        %690 = vmatprep.subr.mxu0 0.0
        %691 = vmatpush2.msra.mxu0 0.0
        %692 = vmatprep.subr.mxu0 0.0
        %693 = vmatpush2.msra.mxu0 0.0
        %694 = vmatprep.subr.mxu0 0.0
        %695 = vmatpush2.msra.mxu0 0.0
        %696 = vmatprep.subr.mxu0 0.0
        %697 = vmatpush2.msra.mxu0 0.0
        %698 = vmatprep.subr.mxu0 0.0
        %699 = vmatpush2.msra.mxu0 0.0
        %700 = vmatprep.subr.mxu0 0.0
        %701 = vmatpush2.msra.mxu0 0.0
        %702 = vmatprep.subr.mxu0 0.0
        %703 = vmatpush2.msra.mxu0 0.0
        %704 = vmatprep.subr.mxu0 0.0
        %705 = vmatpush2.msra.mxu0 0.0
        %706 = vmatprep.subr.mxu0 0.0
        %707 = vmatpush2.msra.mxu0 0.0
        %708 = vmatprep.subr.mxu0 0.0
        %709 = vmatpush2.msra.mxu0 0.0
        %710 = vmatprep.subr.mxu0 0.0
        %711 = vmatpush2.msra.mxu0 0.0
        %712 = vmatprep.mubr.f32.mxu0 0.0
        %713 = vmatmul.mubr.f32.gmra.mxu0 %v566
        %v714 = vpop.f32.mrf.mxu0
        %v715 = vadd.f32 %v640, %v714
        %v716 = vpop.f32.mrf.mxu0
        %717 = vmatprep.mubr.f32.mxu0 0.0
        %718 = vmatmul.mubr.f32.gmra.mxu0 %v563
        %v719 = vpop.f32.mrf.mxu0
        %v720 = vadd.f32 %v645, %v719
        %v721 = vpop.f32.mrf.mxu0
        %722 = vdwg.mxu0
        %723 = vmatprep.subr.mxu0 0.0
        %724 = vmatpush1.msra.mxu0 %v557
        %725 = vmatprep.subr.mxu0 0.0
        %726 = vmatpush1.msra.mxu0 %v556
        %727 = vmatprep.subr.mxu0 0.0
        %728 = vmatpush1.msra.mxu0 %v555
        %729 = vmatprep.subr.mxu0 0.0
        %730 = vmatpush1.msra.mxu0 %v554
        %731 = vmatprep.subr.mxu0 0.0
        %732 = vmatpush1.msra.mxu0 %v553
        %733 = vmatprep.subr.mxu0 0.0
        %734 = vmatpush1.msra.mxu0 %v552
        %735 = vmatprep.subr.mxu0 0.0
        %736 = vmatpush1.msra.mxu0 %v551
        %737 = vmatprep.subr.mxu0 0.0
        %738 = vmatpush1.msra.mxu0 %v550
        %739 = vmatprep.subr.mxu0 0.0
        %740 = vmatpush1.msra.mxu0 %v549
        %741 = vmatprep.subr.mxu0 0.0
        %742 = vmatpush1.msra.mxu0 %v548
        %743 = vmatprep.subr.mxu0 0.0
        %744 = vmatpush1.msra.mxu0 %v547
        %745 = vmatprep.subr.mxu0 0.0
        %746 = vmatpush1.msra.mxu0 %v546
        %747 = vmatprep.subr.mxu0 0.0
        %748 = vmatpush1.msra.mxu0 %v545
        %749 = vmatprep.subr.mxu0 0.0
        %750 = vmatpush1.msra.mxu0 %v544
        %751 = vmatprep.subr.mxu0 0.0
        %752 = vmatpush1.msra.mxu0 %v543
        %753 = vmatprep.subr.mxu0 0.0
        %754 = vmatpush1.msra.mxu0 %v542
        %755 = vmatprep.subr.mxu0 0.0
        %756 = vmatpush2.msra.mxu0 0.0
        %757 = vmatprep.subr.mxu0 0.0
        %758 = vmatpush2.msra.mxu0 0.0
        %759 = vmatprep.subr.mxu0 0.0
        %760 = vmatpush2.msra.mxu0 0.0
        %761 = vmatprep.subr.mxu0 0.0
        %762 = vmatpush2.msra.mxu0 0.0
        %763 = vmatprep.subr.mxu0 0.0
        %764 = vmatpush2.msra.mxu0 0.0
        %765 = vmatprep.subr.mxu0 0.0
        %766 = vmatpush2.msra.mxu0 0.0
        %767 = vmatprep.subr.mxu0 0.0
        %768 = vmatpush2.msra.mxu0 0.0
        %769 = vmatprep.subr.mxu0 0.0
        %770 = vmatpush2.msra.mxu0 0.0
        %771 = vmatprep.subr.mxu0 0.0
        %772 = vmatpush2.msra.mxu0 0.0
        %773 = vmatprep.subr.mxu0 0.0
        %774 = vmatpush2.msra.mxu0 0.0
        %775 = vmatprep.subr.mxu0 0.0
        %776 = vmatpush2.msra.mxu0 0.0
        %777 = vmatprep.subr.mxu0 0.0
        %778 = vmatpush2.msra.mxu0 0.0
        %779 = vmatprep.subr.mxu0 0.0
        %780 = vmatpush2.msra.mxu0 0.0
        %781 = vmatprep.subr.mxu0 0.0
        %782 = vmatpush2.msra.mxu0 0.0
        %783 = vmatprep.subr.mxu0 0.0
        %784 = vmatpush2.msra.mxu0 0.0
        %785 = vmatprep.subr.mxu0 0.0
        %786 = vmatpush2.msra.mxu0 0.0
        %787 = vmatprep.mubr.f32.mxu0 0.0
        %788 = vmatmul.mubr.f32.gmra.mxu0 %v569
        %v789 = vpop.f32.mrf.mxu0
        %v790 = vadd.f32 0.0, %v789
        %v791 = vpop.f32.mrf.mxu0
        %792 = vmatprep.mubr.f32.mxu0 0.0
        %793 = vmatmul.mubr.f32.gmra.mxu0 %v572
        %v794 = vpop.f32.mrf.mxu0
        %v795 = vadd.f32 0.0, %v794
        %v796 = vpop.f32.mrf.mxu0
        %797 = vdwg.mxu0
        %v798 = vadd.f32 %v715, %v790
        %v799 = vadd.f32 %v720, %v795
        %v801 = vlaneseq
        %v802 = vshrl.u32 %v801, 7
        %v803 = vsub.s32 0, %v802
        %v804 = vrot.slane %v558, %v803
        %v806 = vadd.f32 %v798, %v804
        %v807 = vadd.f32 %v799, %v804
        %v808 = vmax.f32 %v806, 0.0
        %v809 = vmax.f32 %v807, 0.0
        %810 = vst [vmem:[%s232] sm:$0xff] %v808
        %811 = vst [vmem:[%s232 + $0x8] sm:$0xff] %v809
        %s812 = sand.u32 %s138, 1
        %s813 = scalar_lea.sflag [#allocation4], %s812
        %s814 = sand.u32 %s138, 1
        %s815 = smul.addr %s814, 16
        %s816 = scalar_lea.vmem [#allocation5], %s815
        // Predicated region
        $region45: #{tpu_custom_call.1} parent=39 // pred_check
          %p817 = pneg %p148
        $region46: #{tpu_custom_call.1} parent=39 // pred_check_branch
          %819 = sbr.rel (%p817) target = $region48
        $region47: #{tpu_custom_call.1} parent=39 // pred_region
          %s821 = ssub.s32 256, 256
          %822 = vsyncadd %s813, %s821
          %s823 = smul.addr %s20, 128
          %s824 = scalar_lea.hbm %s5, %s823
          %s825 = sshll.u32 %s816, 4
          %s826 = int_to_ptr.vmem [resolvable:$true] %s825
          %831 = dma.vmem_to_hbm [thread:$0]  %s826, 256, %s824, %s813, 128, 256, 8
        $region48: #{tpu_custom_call.1} parent=39 // pred_fallthru
          _
      $region40: #{tpu_custom_call.1} parent=5 // pred_fallthru
        _
      %p832 = scmp.le.s32.totalorder 2, %s15
      // Predicated region
      $region49: #{tpu_custom_call.1} parent=5 // pred_check
        %p833 = pneg %p832
      $region50: #{tpu_custom_call.1} parent=5 // pred_check_branch
        %835 = sbr.rel (%p833) target = $region52
      $region51: #{tpu_custom_call.1} parent=5 // pred_region
        %s836 = ssub.s32 %s15, 2
        // Predicated region
        $region53: #{tpu_custom_call.1} parent=51 // pred_check
          %p837 = pneg %p154
        $region54: #{tpu_custom_call.1} parent=51 // pred_check_branch
          %839 = sbr.rel (%p837) target = $region56
        $region55: #{tpu_custom_call.1} parent=51 // pred_region
          %s840 = sand.u32 %s139, 1
          %s841 = scalar_lea.sflag [#allocation4], %s840
          %s842 = sand.u32 %s139, 1
          %s843 = smul.addr %s842, 16
          %s844 = scalar_lea.vmem [#allocation5], %s843
          %845 = dma.done %s841, 256
        $region56: #{tpu_custom_call.1} parent=51 // pred_fallthru
          _
      $region52: #{tpu_custom_call.1} parent=5 // pred_fallthru
        _
    $region6: #{tpu_custom_call.1} parent=1 // loop_footer
      %s19 = sadd.s32 1, %s15
    $region7: #{tpu_custom_call.1} parent=1 // loop_footer_branch
      %14 = sbr.rel target = $region3
    $region8: #{tpu_custom_call.1} parent=1 // loop_exit
      _
    %846 = vsyncpa [#allocation3], 1
    %s847 = scalar_lea.sflag [#allocation3], 1
    %848 = vsyncpa %s847, 1
    %849 = vsyncpa [#allocation4], 1
    %s850 = scalar_lea.sflag [#allocation4], 1
    %851 = vsyncpa %s850, 1

</llo_original>
